<compile_context>
chip_gen: v5e
topology: v5e:2x2
jax: 0.10.0
libtpu: 0.0.40
codegen_flags: <defaults>
</compile_context>

<pallas_src>
import functools

import jax
import jax.numpy as jnp
from jax import lax
from jax.experimental import pallas as pl
from jax.experimental.pallas import tpu as pltpu

EPS = 1e-5


def _round_up(n, m):
    return ((n + m - 1) // m) * m


def _stable_sigmoid(z):
    """Overflow-safe sigmoid: exp on EUP + one approximate reciprocal (EUP)."""
    e = jnp.exp(-jnp.abs(z))
    r = pl.reciprocal(1.0 + e, approx=True)
    return jnp.where(z >= 0.0, r, e * r)


def _bn_scale_shift(s, ss, gamma, beta, inv_n):
    """Fold training-mode BatchNorm1d (batch stats, biased var) into one affine.

    Note: single-pass variance (E[h^2] - E[h]^2) in f32; clamped at 0 to guard
    fp-rounding negatives.  Accurate here because BN inputs are zero-ish mean.
    """
    mu = s * inv_n
    var = jnp.maximum(ss * inv_n - mu * mu, 0.0)
    scale = gamma * lax.rsqrt(var + EPS)
    shift = beta - mu * scale
    return scale, shift


def _affine_relu_bf16(h_bf16, sc, sh):
    """(h * scale + shift) then ReLU; sc/sh dtype selects bf16 or f32 math.
    Result is bf16 (native MXU input for the next matmul)."""
    h = h_bf16.astype(sc.dtype) * sc + sh
    return jnp.maximum(h, 0.0).astype(jnp.bfloat16)


def discriminator_kernel(
    x_ref,
    w1_ref, g1_ref, be1_ref,
    w2_ref, g2_ref, be2_ref,
    w3_ref, g3_ref, be3_ref,
    o_ref,
    h1_buf, h2_buf, s1_ref, ss1_ref, s2_ref, ss2_ref,
    *, batch, tile, grid_tiles, padded, bf16_affine,
):
    i = pl.program_id(0)
    inv_n = 1.0 / batch                       # true batch size (padded rows are 0)
    affine_dtype = jnp.bfloat16 if bf16_affine else jnp.float32

    def _mask_pad_rows(h, j):
        # Zero rows that are batch padding so they never touch BN statistics.
        if not padded:
            return h
        rows = j * tile + lax.broadcasted_iota(jnp.int32, (tile, 1), 0)
        return jnp.where(rows < batch, h, 0.0)

    @pl.when(i == 0)
    def _init():
        s1_ref[...] = jnp.zeros_like(s1_ref)
        ss1_ref[...] = jnp.zeros_like(ss1_ref)

    # ---- pass 1 (pipelined over the batch grid): fc1 + BN1 stat partials ----
    # Zero (padded) x rows + bias-free linear => zero h1 rows => stats unbiased.
    x = x_ref[...].astype(jnp.bfloat16)       # no-op if the producer emits bf16
    h1 = jnp.dot(x, w1_ref[...], preferred_element_type=jnp.float32)  # (TB, 512)
    s1_ref[...] += jnp.sum(h1, axis=0, keepdims=True)
    ss1_ref[...] += jnp.sum(h1 * h1, axis=0, keepdims=True)
    h1_buf[i] = h1.astype(jnp.bfloat16)       # park pre-BN activations in VMEM

    @pl.when(i == grid_tiles - 1)
    def _finalize():
        # ---- BN1 coefficients from the full-batch statistics ----
        scale1, shift1 = _bn_scale_shift(s1_ref[...], ss1_ref[...],
                                         g1_ref[...], be1_ref[...], inv_n)
        sc1 = scale1.astype(affine_dtype)     # hoisted: cast/broadcast once
        sh1 = shift1.astype(affine_dtype)

        s2_ref[...] = jnp.zeros_like(s2_ref)
        ss2_ref[...] = jnp.zeros_like(ss2_ref)

        # ---- pass 2 (from VMEM): bn1+relu, fc2, BN2 stat partials ----
        def _pass2(j, carry):
            h = _mask_pad_rows(_affine_relu_bf16(h1_buf[j], sc1, sh1), j)
            h2 = jnp.dot(h, w2_ref[...], preferred_element_type=jnp.float32)
            s2_ref[...] += jnp.sum(h2, axis=0, keepdims=True)
            ss2_ref[...] += jnp.sum(h2 * h2, axis=0, keepdims=True)
            h2_buf[j] = h2.astype(jnp.bfloat16)
            return carry

        lax.fori_loop(0, grid_tiles, _pass2, None)

        # ---- BN2 coefficients ----
        scale2, shift2 = _bn_scale_shift(s2_ref[...], ss2_ref[...],
                                         g2_ref[...], be2_ref[...], inv_n)
        sc2 = scale2.astype(affine_dtype)
        sh2 = shift2.astype(affine_dtype)
        w3_row = w3_ref[...].astype(jnp.float32)          # (1, 256), hoisted

        # ---- pass 3: bn2+relu, fc3 (out_features=1 -> VPU mul + lane reduce);
        #      raw pre-BN3 values land in the resident output block ----
        def _pass3(j, carry):
            h = _mask_pad_rows(_affine_relu_bf16(h2_buf[j], sc2, sh2), j)
            h3 = jnp.sum(h.astype(jnp.float32) * w3_row, axis=-1, keepdims=True)
            o_ref[j] = h3                                  # (TB, 1) f32
            return carry

        lax.fori_loop(0, grid_tiles, _pass3, None)

        # ---- BN3 (single feature, batch stats) + sigmoid, whole output ----
        h3_all = o_ref[...]                                # (T, TB, 1), pad rows = 0
        s3 = jnp.sum(jnp.sum(h3_all, axis=0), axis=0, keepdims=True)          # (1,1)
        ss3 = jnp.sum(jnp.sum(h3_all * h3_all, axis=0), axis=0, keepdims=True)
        scale3, shift3 = _bn_scale_shift(s3, ss3, g3_ref[...], be3_ref[...], inv_n)
        o_ref[...] = _stable_sigmoid(h3_all * scale3 + shift3).astype(o_ref.dtype)


def _batch_tile(batch):
    """Batch tile: multiple of 16 sublanes (bf16 packing); 256 (multiple of 128,
    so the MXU M-dim is fully fed on every generation) once the batch is big."""
    if batch <= 256:
        return _round_up(batch, 16)
    return 256


def _bf16_affine_ok():
    """bf16 VALU exists on v6e/v7x; on v5e and older a bf16 affine just adds casts."""
    try:
        kind = jax.devices()[0].device_kind.lower()
    except Exception:
        return True
    return not any(t in kind for t in ("v2", "v3", "v4", "v5"))


def _vmem_limit_bytes(tile, tiles, x_itemsize):
    weights = (768 * 512 + 512 * 256 + 256) * 2            # bf16 weights
    bn_params = (512 + 256 + 1) * 2 * 4                    # f32 gamma/beta
    x_tile = tile * 768 * x_itemsize
    out = tiles * tile * 4
    h_bufs = tiles * tile * (512 + 256) * 2                 # bf16 resident activations
    stats = (512 + 256) * 2 * 4
    est = 2 * (weights + bn_params + x_tile + out) + h_bufs + stats  # 2x: double-buffered I/O
    est += tile * (512 + 256) * 4 + (4 << 20)               # f32 matmul temps + margin
    return int(min(64 * 1024 * 1024, max(est, 16 * 1024 * 1024)))    # 64 MiB = v7x physical


@jax.jit
def discriminator_forward(x, params):
    """x: (B, 768) float32 or bfloat16.  Returns (B, 1) float32 in (0, 1)."""
    B = x.shape[0]
    tile = _batch_tile(B)
    B_pad = _round_up(B, tile)
    tiles = B_pad // tile
    padded = B_pad != B
    if padded:
        x = jnp.pad(x, ((0, B_pad - B), (0, 0)))           # zero rows: BN-neutral

    kernel = functools.partial(
        discriminator_kernel, batch=B, tile=tile, grid_tiles=tiles,
        padded=padded, bf16_affine=_bf16_affine_ok())

    args = (
        x,
        params["w1"], params["g1"], params["be1"],
        params["w2"], params["g2"], params["be2"],
        params["w3"], params["g3"], params["be3"],
    )

    def resident(shape):
        return pl.BlockSpec(shape, lambda i: (0,) * len(shape))

    in_specs = [
        pl.BlockSpec((tile, 768), lambda i: (i, 0)),        # x: tiled over the batch
        resident((768, 512)), resident((1, 512)), resident((1, 512)),
        resident((512, 256)), resident((1, 256)), resident((1, 256)),
        resident((1, 256)), resident((1, 1)), resident((1, 1)),
    ]
    out_specs = pl.BlockSpec((tiles, tile, 1), lambda i: (0, 0, 0))

    flops = 2 * B_pad * (768 * 512 + 512 * 256 + 256)
    transcendentals = 2 * B_pad + (512 + 256 + 1)           # exp + recip + rsqrt
    bytes_accessed = (
        x.size * x.dtype.itemsize
        + sum(int(a.size) * a.dtype.itemsize for a in args[1:])
        + B_pad * 4)

    out = pl.pallas_call(
        kernel,
        out_shape=jax.ShapeDtypeStruct((tiles, tile, 1), jnp.float32),
        grid_spec=pltpu.PrefetchScalarGridSpec(
            num_scalar_prefetch=0,
            grid=(tiles,),
            in_specs=in_specs,
            out_specs=out_specs,
            scratch_shapes=[
                pltpu.VMEM((tiles, tile, 512), jnp.bfloat16),   # pre-BN h1 (resident)
                pltpu.VMEM((tiles, tile, 256), jnp.bfloat16),   # pre-BN h2 (resident)
                pltpu.VMEM((1, 512), jnp.float32),              # BN1 sum
                pltpu.VMEM((1, 512), jnp.float32),              # BN1 sum of squares
                pltpu.VMEM((1, 256), jnp.float32),              # BN2 sum
                pltpu.VMEM((1, 256), jnp.float32),              # BN2 sum of squares
            ]),
        compiler_params=pltpu.CompilerParams(
            dimension_semantics=("arbitrary",),
            vmem_limit_bytes=_vmem_limit_bytes(tile, tiles, x.dtype.itemsize)),
        cost_estimate=pl.CostEstimate(
            flops=flops, transcendentals=transcendentals,
            bytes_accessed=bytes_accessed),
    )(*args)
    return out.reshape(B_pad, 1)[:B]


def init_params(key):
    """Init mirroring nn.Linear / nn.BatchNorm1d defaults.

    Weights: U(-1/sqrt(fan_in), 1/sqrt(fan_in)), stored (in, out) in bf16 (halves
    the dominant weight DMA; native MXU dtype).  Linear biases omitted (cancelled
    exactly by training-mode BN).  BN gamma=1, beta=0 in f32.  w3 stored (1, 256)
    for the VPU dot in layer3.
    """
    dims = [(768, 512), (512, 256), (256, 1)]
    params = {}
    keys = jax.random.split(key, len(dims))
    for i, (fan_in, fan_out) in enumerate(dims, start=1):
        bound = 1.0 / (fan_in ** 0.5)
        w = jax.random.uniform(keys[i - 1], (fan_in, fan_out), jnp.float32,
                               -bound, bound)
        if fan_out == 1:
            params[f"w{i}"] = w.reshape(1, fan_in).astype(jnp.bfloat16)
        else:
            params[f"w{i}"] = w.astype(jnp.bfloat16)
        params[f"g{i}"] = jnp.ones((1, fan_out), jnp.float32)
        params[f"be{i}"] = jnp.zeros((1, fan_out), jnp.float32)
    return params


def _reference_forward(x, params):
    """Pure-JAX reference (f32 math on the same quantized weights)."""
    def bn(h, g, b):
        mu = jnp.mean(h, axis=0, keepdims=True)
        var = jnp.mean((h - mu) ** 2, axis=0, keepdims=True)
        return (h - mu) * lax.rsqrt(var + EPS) * g + b

    h = x
    h = jnp.maximum(bn(h @ params["w1"].astype(jnp.float32),
                       params["g1"], params["be1"]), 0.0)
    h = jnp.maximum(bn(h @ params["w2"].astype(jnp.float32),
                       params["g2"], params["be2"]), 0.0)
    h = bn(h @ params["w3"].astype(jnp.float32).T, params["g3"], params["be3"])
    return jax.nn.sigmoid(h)


if __name__ == "__main__":
    key = jax.random.PRNGKey(0)
    k_param, k_x = jax.random.split(key)
    params = init_params(k_param)

    # blca_batch_size stand-ins: B=16 exercises the single-tile path,
    # B=300 exercises the multi-tile + padded-batch (masked BN stats) path.
    for B in (16, 300):
        xb = jax.random.normal(jax.random.fold_in(k_x, B), (B, 768), jnp.float32)
        out = jax.block_until_ready(discriminator_forward(xb, params))

        assert out.shape == (B, 1), out.shape
        assert bool(jnp.all((out > 0.0) & (out < 1.0)))

        ref = _reference_forward(xb, params)
        err = float(jnp.max(jnp.abs(out - ref)))
        # bf16 weights/activations + approx reciprocal => loose tolerance by design.
        assert err < 0.06, (B, err)

    print("KERNEL_OK")
</pallas_src>

<mosaic_0001>
module attributes {stable_mosaic.version = 11 : i64} {
  func.func @discriminator_kernel(%arg0: i32, %arg1: memref<16x768xf32, #tpu.memory_space<vmem>>, %arg2: memref<768x512xbf16, #tpu.memory_space<vmem>>, %arg3: memref<1x512xf32, #tpu.memory_space<vmem>>, %arg4: memref<1x512xf32, #tpu.memory_space<vmem>>, %arg5: memref<512x256xbf16, #tpu.memory_space<vmem>>, %arg6: memref<1x256xf32, #tpu.memory_space<vmem>>, %arg7: memref<1x256xf32, #tpu.memory_space<vmem>>, %arg8: memref<1x256xbf16, #tpu.memory_space<vmem>>, %arg9: memref<1x1xf32, #tpu.memory_space<vmem>>, %arg10: memref<1x1xf32, #tpu.memory_space<vmem>>, %arg11: memref<1x16x1xf32, #tpu.memory_space<vmem>>, %arg12: memref<1x16x512xbf16, #tpu.memory_space<vmem>>, %arg13: memref<1x16x256xbf16, #tpu.memory_space<vmem>>, %arg14: memref<1x512xf32, #tpu.memory_space<vmem>>, %arg15: memref<1x512xf32, #tpu.memory_space<vmem>>, %arg16: memref<1x256xf32, #tpu.memory_space<vmem>>, %arg17: memref<1x256xf32, #tpu.memory_space<vmem>>) attributes {dimension_semantics = [#tpu.dimension_semantics<arbitrary>], iteration_bounds = array<i64: 1>, scalar_prefetch = 0 : i64, scratch_operands = 6 : i64, tpu.core_type = #tpu.core_type<tc>, window_params = [{transform_indices = @transform_0, window_bounds = array<i64: 16, 768>}, {pipeline_mode = #tpu.pipeline_mode<synchronous>, transform_indices = @transform_1, window_bounds = array<i64: 768, 512>}, {pipeline_mode = #tpu.pipeline_mode<synchronous>, transform_indices = @transform_2, window_bounds = array<i64: 1, 512>}, {pipeline_mode = #tpu.pipeline_mode<synchronous>, transform_indices = @transform_3, window_bounds = array<i64: 1, 512>}, {pipeline_mode = #tpu.pipeline_mode<synchronous>, transform_indices = @transform_4, window_bounds = array<i64: 512, 256>}, {pipeline_mode = #tpu.pipeline_mode<synchronous>, transform_indices = @transform_5, window_bounds = array<i64: 1, 256>}, {pipeline_mode = #tpu.pipeline_mode<synchronous>, transform_indices = @transform_6, window_bounds = array<i64: 1, 256>}, {pipeline_mode = #tpu.pipeline_mode<synchronous>, transform_indices = @transform_7, window_bounds = array<i64: 1, 256>}, {pipeline_mode = #tpu.pipeline_mode<synchronous>, transform_indices = @transform_8, window_bounds = array<i64: 1, 1>}, {pipeline_mode = #tpu.pipeline_mode<synchronous>, transform_indices = @transform_9, window_bounds = array<i64: 1, 1>}, {pipeline_mode = #tpu.pipeline_mode<synchronous>, transform_indices = @transform_10, window_bounds = array<i64: 1, 16, 1>}]} {
    %c0_i32 = arith.constant 0 : i32
    %0 = arith.cmpi eq, %arg0, %c0_i32 : i32
    %1 = arith.extui %0 : i1 to i32
    %c0_i32_0 = arith.constant 0 : i32
    %2 = arith.cmpi ne, %1, %c0_i32_0 : i32
    scf.if %2 {
      %cst_18 = arith.constant 0.000000e+00 : f32
      %26 = vector.broadcast %cst_18 : f32 to vector<1x512xf32>
      %c0_19 = arith.constant 0 : index
      %c0_20 = arith.constant 0 : index
      %27 = vector.load %arg14[%c0_19, %c0_20] : memref<1x512xf32, #tpu.memory_space<vmem>>, vector<1x512xf32>
      tpu.vector_store %arg14[%c0_19, %c0_20], %26 {strides = array<i32>} : memref<1x512xf32, #tpu.memory_space<vmem>>, vector<1x512xf32>,
      %cst_21 = arith.constant 0.000000e+00 : f32
      %28 = vector.broadcast %cst_21 : f32 to vector<1x512xf32>
      %c0_22 = arith.constant 0 : index
      %c0_23 = arith.constant 0 : index
      %29 = vector.load %arg15[%c0_22, %c0_23] : memref<1x512xf32, #tpu.memory_space<vmem>>, vector<1x512xf32>
      tpu.vector_store %arg15[%c0_22, %c0_23], %28 {strides = array<i32>} : memref<1x512xf32, #tpu.memory_space<vmem>>, vector<1x512xf32>,
    } else {
    }
    %c0 = arith.constant 0 : index
    %c0_1 = arith.constant 0 : index
    %3 = vector.load %arg1[%c0, %c0_1] : memref<16x768xf32, #tpu.memory_space<vmem>>, vector<16x768xf32>
    %4 = arith.truncf %3 : vector<16x768xf32> to vector<16x768xbf16>
    %c0_2 = arith.constant 0 : index
    %c0_3 = arith.constant 0 : index
    %5 = vector.load %arg2[%c0_2, %c0_3] : memref<768x512xbf16, #tpu.memory_space<vmem>>, vector<768x512xbf16>
    %cst = arith.constant dense<0.000000e+00> : vector<16x512xf32>
    %6 = tpu.matmul %4, %5, %cst {dimension_numbers = #tpu.dot_dimension_numbers<[1], [0], [0], [1], [0, 0, 1, 1], [], []>} : vector<16x768xbf16>, vector<768x512xbf16>, vector<16x512xf32> -> vector<16x512xf32>
    %c0_4 = arith.constant 0 : index
    %c0_5 = arith.constant 0 : index
    %7 = vector.load %arg14[%c0_4, %c0_5] : memref<1x512xf32, #tpu.memory_space<vmem>>, vector<1x512xf32>
    %cst_6 = arith.constant dense<0.000000e+00> : vector<512xf32>
    %8 = vector.multi_reduction <add>, %6, %cst_6 [0] : vector<16x512xf32> to vector<512xf32>
    %9 = vector.shape_cast %8 : vector<512xf32> to vector<1x512xf32>
    %10 = arith.addf %7, %9 : vector<1x512xf32>
    %c0_7 = arith.constant 0 : index
    %c0_8 = arith.constant 0 : index
    %11 = vector.load %arg14[%c0_7, %c0_8] : memref<1x512xf32, #tpu.memory_space<vmem>>, vector<1x512xf32>
    tpu.vector_store %arg14[%c0_7, %c0_8], %10 {strides = array<i32>} : memref<1x512xf32, #tpu.memory_space<vmem>>, vector<1x512xf32>,
    %c0_9 = arith.constant 0 : index
    %c0_10 = arith.constant 0 : index
    %12 = vector.load %arg15[%c0_9, %c0_10] : memref<1x512xf32, #tpu.memory_space<vmem>>, vector<1x512xf32>
    %13 = arith.mulf %6, %6 : vector<16x512xf32>
    %cst_11 = arith.constant dense<0.000000e+00> : vector<512xf32>
    %14 = vector.multi_reduction <add>, %13, %cst_11 [0] : vector<16x512xf32> to vector<512xf32>
    %15 = vector.shape_cast %14 : vector<512xf32> to vector<1x512xf32>
    %16 = arith.addf %12, %15 : vector<1x512xf32>
    %c0_12 = arith.constant 0 : index
    %c0_13 = arith.constant 0 : index
    %17 = vector.load %arg15[%c0_12, %c0_13] : memref<1x512xf32, #tpu.memory_space<vmem>>, vector<1x512xf32>
    tpu.vector_store %arg15[%c0_12, %c0_13], %16 {strides = array<i32>} : memref<1x512xf32, #tpu.memory_space<vmem>>, vector<1x512xf32>,
    %18 = arith.truncf %6 : vector<16x512xf32> to vector<16x512xbf16>
    %19 = arith.index_cast %arg0 : i32 to index
    %c0_14 = arith.constant 0 : index
    %c0_15 = arith.constant 0 : index
    %20 = vector.load %arg12[%19, %c0_14, %c0_15] : memref<1x16x512xbf16, #tpu.memory_space<vmem>>, vector<1x16x512xbf16>
    %21 = vector.shape_cast %20 : vector<1x16x512xbf16> to vector<16x512xbf16>
    %22 = vector.shape_cast %18 : vector<16x512xbf16> to vector<1x16x512xbf16>
    tpu.vector_store %arg12[%19, %c0_14, %c0_15], %22 {strides = array<i32>} : memref<1x16x512xbf16, #tpu.memory_space<vmem>>, vector<1x16x512xbf16>,
    %c0_i32_16 = arith.constant 0 : i32
    %23 = arith.cmpi eq, %arg0, %c0_i32_16 : i32
    %24 = arith.extui %23 : i1 to i32
    %c0_i32_17 = arith.constant 0 : i32
    %25 = arith.cmpi ne, %24, %c0_i32_17 : i32
    scf.if %25 {
      %c0_18 = arith.constant 0 : index
      %c0_19 = arith.constant 0 : index
      %26 = vector.load %arg14[%c0_18, %c0_19] : memref<1x512xf32, #tpu.memory_space<vmem>>, vector<1x512xf32>
      %c0_20 = arith.constant 0 : index
      %c0_21 = arith.constant 0 : index
      %27 = vector.load %arg15[%c0_20, %c0_21] : memref<1x512xf32, #tpu.memory_space<vmem>>, vector<1x512xf32>
      %c0_22 = arith.constant 0 : index
      %c0_23 = arith.constant 0 : index
      %28 = vector.load %arg3[%c0_22, %c0_23] : memref<1x512xf32, #tpu.memory_space<vmem>>, vector<1x512xf32>
      %c0_24 = arith.constant 0 : index
      %c0_25 = arith.constant 0 : index
      %29 = vector.load %arg4[%c0_24, %c0_25] : memref<1x512xf32, #tpu.memory_space<vmem>>, vector<1x512xf32>
      %cst_26 = arith.constant 6.250000e-02 : f32
      %30 = vector.broadcast %cst_26 : f32 to vector<1x512xf32>
      %31 = arith.mulf %26, %30 : vector<1x512xf32>
      %cst_27 = arith.constant 6.250000e-02 : f32
      %32 = vector.broadcast %cst_27 : f32 to vector<1x512xf32>
      %33 = arith.mulf %27, %32 : vector<1x512xf32>
      %34 = arith.mulf %31, %31 : vector<1x512xf32>
      %35 = arith.subf %33, %34 : vector<1x512xf32>
      %cst_28 = arith.constant 0.000000e+00 : f32
      %36 = vector.broadcast %cst_28 : f32 to vector<1x512xf32>
      %37 = arith.maximumf %35, %36 : vector<1x512xf32>
      %cst_29 = arith.constant 9.99999974E-6 : f32
      %38 = vector.broadcast %cst_29 : f32 to vector<1x512xf32>
      %39 = arith.addf %37, %38 : vector<1x512xf32>
      %40 = math.rsqrt %39 : vector<1x512xf32>
      %41 = arith.mulf %28, %40 : vector<1x512xf32>
      %42 = arith.mulf %31, %41 : vector<1x512xf32>
      %43 = arith.subf %29, %42 : vector<1x512xf32>
      %44 = arith.truncf %41 : vector<1x512xf32> to vector<1x512xbf16>
      %45 = arith.truncf %43 : vector<1x512xf32> to vector<1x512xbf16>
      %cst_30 = arith.constant 0.000000e+00 : f32
      %46 = vector.broadcast %cst_30 : f32 to vector<1x256xf32>
      %c0_31 = arith.constant 0 : index
      %c0_32 = arith.constant 0 : index
      %47 = vector.load %arg16[%c0_31, %c0_32] : memref<1x256xf32, #tpu.memory_space<vmem>>, vector<1x256xf32>
      tpu.vector_store %arg16[%c0_31, %c0_32], %46 {strides = array<i32>} : memref<1x256xf32, #tpu.memory_space<vmem>>, vector<1x256xf32>,
      %cst_33 = arith.constant 0.000000e+00 : f32
      %48 = vector.broadcast %cst_33 : f32 to vector<1x256xf32>
      %c0_34 = arith.constant 0 : index
      %c0_35 = arith.constant 0 : index
      %49 = vector.load %arg17[%c0_34, %c0_35] : memref<1x256xf32, #tpu.memory_space<vmem>>, vector<1x256xf32>
      tpu.vector_store %arg17[%c0_34, %c0_35], %48 {strides = array<i32>} : memref<1x256xf32, #tpu.memory_space<vmem>>, vector<1x256xf32>,
      %c0_i32_36 = arith.constant 0 : i32
      %50 = arith.index_cast %c0_i32_36 : i32 to index
      %c0_37 = arith.constant 0 : index
      %c0_38 = arith.constant 0 : index
      %51 = vector.load %arg12[%50, %c0_37, %c0_38] : memref<1x16x512xbf16, #tpu.memory_space<vmem>>, vector<1x16x512xbf16>
      %52 = vector.shape_cast %51 : vector<1x16x512xbf16> to vector<16x512xbf16>
      %53 = vector.broadcast %44 : vector<1x512xbf16> to vector<16x512xbf16>
      %54 = arith.mulf %52, %53 : vector<16x512xbf16>
      %55 = vector.broadcast %45 : vector<1x512xbf16> to vector<16x512xbf16>
      %56 = arith.addf %54, %55 : vector<16x512xbf16>
      %cst_39 = arith.constant 0.000000e+00 : bf16
      %57 = vector.broadcast %cst_39 : bf16 to vector<16x512xbf16>
      %58 = arith.maximumf %56, %57 : vector<16x512xbf16>
      %c0_40 = arith.constant 0 : index
      %c0_41 = arith.constant 0 : index
      %59 = vector.load %arg5[%c0_40, %c0_41] : memref<512x256xbf16, #tpu.memory_space<vmem>>, vector<512x256xbf16>
      %cst_42 = arith.constant dense<0.000000e+00> : vector<16x256xf32>
      %60 = tpu.matmul %58, %59, %cst_42 {dimension_numbers = #tpu.dot_dimension_numbers<[1], [0], [0], [1], [0, 0, 1, 1], [], []>} : vector<16x512xbf16>, vector<512x256xbf16>, vector<16x256xf32> -> vector<16x256xf32>
      %c0_43 = arith.constant 0 : index
      %c0_44 = arith.constant 0 : index
      %61 = vector.load %arg16[%c0_43, %c0_44] : memref<1x256xf32, #tpu.memory_space<vmem>>, vector<1x256xf32>
      %cst_45 = arith.constant dense<0.000000e+00> : vector<256xf32>
      %62 = vector.multi_reduction <add>, %60, %cst_45 [0] : vector<16x256xf32> to vector<256xf32>
      %63 = vector.shape_cast %62 : vector<256xf32> to vector<1x256xf32>
      %64 = arith.addf %61, %63 : vector<1x256xf32>
      %c0_46 = arith.constant 0 : index
      %c0_47 = arith.constant 0 : index
      %65 = vector.load %arg16[%c0_46, %c0_47] : memref<1x256xf32, #tpu.memory_space<vmem>>, vector<1x256xf32>
      tpu.vector_store %arg16[%c0_46, %c0_47], %64 {strides = array<i32>} : memref<1x256xf32, #tpu.memory_space<vmem>>, vector<1x256xf32>,
      %c0_48 = arith.constant 0 : index
      %c0_49 = arith.constant 0 : index
      %66 = vector.load %arg17[%c0_48, %c0_49] : memref<1x256xf32, #tpu.memory_space<vmem>>, vector<1x256xf32>
      %67 = arith.mulf %60, %60 : vector<16x256xf32>
      %cst_50 = arith.constant dense<0.000000e+00> : vector<256xf32>
      %68 = vector.multi_reduction <add>, %67, %cst_50 [0] : vector<16x256xf32> to vector<256xf32>
      %69 = vector.shape_cast %68 : vector<256xf32> to vector<1x256xf32>
      %70 = arith.addf %66, %69 : vector<1x256xf32>
      %c0_51 = arith.constant 0 : index
      %c0_52 = arith.constant 0 : index
      %71 = vector.load %arg17[%c0_51, %c0_52] : memref<1x256xf32, #tpu.memory_space<vmem>>, vector<1x256xf32>
      tpu.vector_store %arg17[%c0_51, %c0_52], %70 {strides = array<i32>} : memref<1x256xf32, #tpu.memory_space<vmem>>, vector<1x256xf32>,
      %72 = arith.truncf %60 : vector<16x256xf32> to vector<16x256xbf16>
      %73 = arith.index_cast %c0_i32_36 : i32 to index
      %c0_53 = arith.constant 0 : index
      %c0_54 = arith.constant 0 : index
      %74 = vector.load %arg13[%73, %c0_53, %c0_54] : memref<1x16x256xbf16, #tpu.memory_space<vmem>>, vector<1x16x256xbf16>
      %75 = vector.shape_cast %74 : vector<1x16x256xbf16> to vector<16x256xbf16>
      %76 = vector.shape_cast %72 : vector<16x256xbf16> to vector<1x16x256xbf16>
      tpu.vector_store %arg13[%73, %c0_53, %c0_54], %76 {strides = array<i32>} : memref<1x16x256xbf16, #tpu.memory_space<vmem>>, vector<1x16x256xbf16>,
      %c1_i32 = arith.constant 1 : i32
      %c0_55 = arith.constant 0 : index
      %c0_56 = arith.constant 0 : index
      %77 = vector.load %arg16[%c0_55, %c0_56] : memref<1x256xf32, #tpu.memory_space<vmem>>, vector<1x256xf32>
      %c0_57 = arith.constant 0 : index
      %c0_58 = arith.constant 0 : index
      %78 = vector.load %arg17[%c0_57, %c0_58] : memref<1x256xf32, #tpu.memory_space<vmem>>, vector<1x256xf32>
      %c0_59 = arith.constant 0 : index
      %c0_60 = arith.constant 0 : index
      %79 = vector.load %arg6[%c0_59, %c0_60] : memref<1x256xf32, #tpu.memory_space<vmem>>, vector<1x256xf32>
      %c0_61 = arith.constant 0 : index
      %c0_62 = arith.constant 0 : index
      %80 = vector.load %arg7[%c0_61, %c0_62] : memref<1x256xf32, #tpu.memory_space<vmem>>, vector<1x256xf32>
      %cst_63 = arith.constant 6.250000e-02 : f32
      %81 = vector.broadcast %cst_63 : f32 to vector<1x256xf32>
      %82 = arith.mulf %77, %81 : vector<1x256xf32>
      %cst_64 = arith.constant 6.250000e-02 : f32
      %83 = vector.broadcast %cst_64 : f32 to vector<1x256xf32>
      %84 = arith.mulf %78, %83 : vector<1x256xf32>
      %85 = arith.mulf %82, %82 : vector<1x256xf32>
      %86 = arith.subf %84, %85 : vector<1x256xf32>
      %cst_65 = arith.constant 0.000000e+00 : f32
      %87 = vector.broadcast %cst_65 : f32 to vector<1x256xf32>
      %88 = arith.maximumf %86, %87 : vector<1x256xf32>
      %cst_66 = arith.constant 9.99999974E-6 : f32
      %89 = vector.broadcast %cst_66 : f32 to vector<1x256xf32>
      %90 = arith.addf %88, %89 : vector<1x256xf32>
      %91 = math.rsqrt %90 : vector<1x256xf32>
      %92 = arith.mulf %79, %91 : vector<1x256xf32>
      %93 = arith.mulf %82, %92 : vector<1x256xf32>
      %94 = arith.subf %80, %93 : vector<1x256xf32>
      %95 = arith.truncf %92 : vector<1x256xf32> to vector<1x256xbf16>
      %96 = arith.truncf %94 : vector<1x256xf32> to vector<1x256xbf16>
      %c0_67 = arith.constant 0 : index
      %c0_68 = arith.constant 0 : index
      %97 = vector.load %arg8[%c0_67, %c0_68] : memref<1x256xbf16, #tpu.memory_space<vmem>>, vector<1x256xbf16>
      %98 = arith.extf %97 : vector<1x256xbf16> to vector<1x256xf32>
      %c0_i32_69 = arith.constant 0 : i32
      %99 = arith.index_cast %c0_i32_69 : i32 to index
      %c0_70 = arith.constant 0 : index
      %c0_71 = arith.constant 0 : index
      %100 = vector.load %arg13[%99, %c0_70, %c0_71] : memref<1x16x256xbf16, #tpu.memory_space<vmem>>, vector<1x16x256xbf16>
      %101 = vector.shape_cast %100 : vector<1x16x256xbf16> to vector<16x256xbf16>
      %102 = vector.broadcast %95 : vector<1x256xbf16> to vector<16x256xbf16>
      %103 = arith.mulf %101, %102 : vector<16x256xbf16>
      %104 = vector.broadcast %96 : vector<1x256xbf16> to vector<16x256xbf16>
      %105 = arith.addf %103, %104 : vector<16x256xbf16>
      %cst_72 = arith.constant 0.000000e+00 : bf16
      %106 = vector.broadcast %cst_72 : bf16 to vector<16x256xbf16>
      %107 = arith.maximumf %105, %106 : vector<16x256xbf16>
      %108 = arith.extf %107 : vector<16x256xbf16> to vector<16x256xf32>
      %109 = vector.broadcast %98 : vector<1x256xf32> to vector<16x256xf32>
      %110 = arith.mulf %108, %109 : vector<16x256xf32>
      %cst_73 = arith.constant dense<0.000000e+00> : vector<16xf32>
      %111 = vector.multi_reduction <add>, %110, %cst_73 [1] : vector<16x256xf32> to vector<16xf32>
      %112 = vector.shape_cast %111 : vector<16xf32> to vector<16x1xf32>
      %113 = arith.index_cast %c0_i32_69 : i32 to index
      %c0_74 = arith.constant 0 : index
      %c0_75 = arith.constant 0 : index
      %114 = vector.load %arg11[%113, %c0_74, %c0_75] : memref<1x16x1xf32, #tpu.memory_space<vmem>>, vector<1x16x1xf32>
      %115 = vector.shape_cast %114 : vector<1x16x1xf32> to vector<16x1xf32>
      %116 = vector.shape_cast %112 : vector<16x1xf32> to vector<1x16x1xf32>
      tpu.vector_store %arg11[%113, %c0_74, %c0_75], %116 {strides = array<i32>} : memref<1x16x1xf32, #tpu.memory_space<vmem>>, vector<1x16x1xf32>,
      %c1_i32_76 = arith.constant 1 : i32
      %c0_77 = arith.constant 0 : index
      %c0_78 = arith.constant 0 : index
      %c0_79 = arith.constant 0 : index
      %117 = vector.load %arg11[%c0_77, %c0_78, %c0_79] : memref<1x16x1xf32, #tpu.memory_space<vmem>>, vector<1x16x1xf32>
      %cst_80 = arith.constant dense<0.000000e+00> : vector<16x1xf32>
      %118 = vector.multi_reduction <add>, %117, %cst_80 [0] : vector<1x16x1xf32> to vector<16x1xf32>
      %cst_81 = arith.constant dense<0.000000e+00> : vector<1xf32>
      %119 = vector.multi_reduction <add>, %118, %cst_81 [0] : vector<16x1xf32> to vector<1xf32>
      %120 = vector.shape_cast %119 : vector<1xf32> to vector<1x1xf32>
      %121 = arith.mulf %117, %117 : vector<1x16x1xf32>
      %cst_82 = arith.constant dense<0.000000e+00> : vector<16x1xf32>
      %122 = vector.multi_reduction <add>, %121, %cst_82 [0] : vector<1x16x1xf32> to vector<16x1xf32>
      %cst_83 = arith.constant dense<0.000000e+00> : vector<1xf32>
      %123 = vector.multi_reduction <add>, %122, %cst_83 [0] : vector<16x1xf32> to vector<1xf32>
      %124 = vector.shape_cast %123 : vector<1xf32> to vector<1x1xf32>
      %c0_84 = arith.constant 0 : index
      %c0_85 = arith.constant 0 : index
      %125 = vector.load %arg9[%c0_84, %c0_85] : memref<1x1xf32, #tpu.memory_space<vmem>>, vector<1x1xf32>
      %c0_86 = arith.constant 0 : index
      %c0_87 = arith.constant 0 : index
      %126 = vector.load %arg10[%c0_86, %c0_87] : memref<1x1xf32, #tpu.memory_space<vmem>>, vector<1x1xf32>
      %cst_88 = arith.constant 6.250000e-02 : f32
      %127 = vector.broadcast %cst_88 : f32 to vector<1x1xf32>
      %128 = arith.mulf %120, %127 : vector<1x1xf32>
      %cst_89 = arith.constant 6.250000e-02 : f32
      %129 = vector.broadcast %cst_89 : f32 to vector<1x1xf32>
      %130 = arith.mulf %124, %129 : vector<1x1xf32>
      %131 = arith.mulf %128, %128 : vector<1x1xf32>
      %132 = arith.subf %130, %131 : vector<1x1xf32>
      %cst_90 = arith.constant 0.000000e+00 : f32
      %133 = vector.broadcast %cst_90 : f32 to vector<1x1xf32>
      %134 = arith.maximumf %132, %133 : vector<1x1xf32>
      %cst_91 = arith.constant 9.99999974E-6 : f32
      %135 = vector.broadcast %cst_91 : f32 to vector<1x1xf32>
      %136 = arith.addf %134, %135 : vector<1x1xf32>
      %137 = math.rsqrt %136 : vector<1x1xf32>
      %138 = arith.mulf %125, %137 : vector<1x1xf32>
      %139 = arith.mulf %128, %138 : vector<1x1xf32>
      %140 = arith.subf %126, %139 : vector<1x1xf32>
      %141 = vector.shape_cast %138 : vector<1x1xf32> to vector<1x1x1xf32>
      %142 = vector.broadcast %141 : vector<1x1x1xf32> to vector<1x16x1xf32>
      %143 = arith.mulf %117, %142 : vector<1x16x1xf32>
      %144 = vector.shape_cast %140 : vector<1x1xf32> to vector<1x1x1xf32>
      %145 = vector.broadcast %144 : vector<1x1x1xf32> to vector<1x16x1xf32>
      %146 = arith.addf %143, %145 : vector<1x16x1xf32>
      %147 = math.absf %146 : vector<1x16x1xf32>
      %cst_92 = arith.constant 0.000000e+00 : f32
      %148 = vector.broadcast %cst_92 : f32 to vector<1x16x1xf32>
      %149 = arith.subf %148, %147 : vector<1x16x1xf32>
      %150 = math.exp %149 : vector<1x16x1xf32>
      %cst_93 = arith.constant 1.000000e+00 : f32
      %151 = vector.broadcast %cst_93 : f32 to vector<1x16x1xf32>
      %152 = arith.addf %151, %150 : vector<1x16x1xf32>
      %153 = tpu.reciprocal %152 {approx = true} : vector<1x16x1xf32> -> vector<1x16x1xf32>
      %cst_94 = arith.constant 0.000000e+00 : f32
      %154 = vector.broadcast %cst_94 : f32 to vector<1x16x1xf32>
      %155 = arith.cmpf oge, %146, %154 : vector<1x16x1xf32>
      %156 = arith.mulf %150, %153 : vector<1x16x1xf32>
      %157 = arith.select %155, %153, %156 : vector<1x16x1xi1>, vector<1x16x1xf32>
      %c0_95 = arith.constant 0 : index
      %c0_96 = arith.constant 0 : index
      %c0_97 = arith.constant 0 : index
      %158 = vector.load %arg11[%c0_95, %c0_96, %c0_97] : memref<1x16x1xf32, #tpu.memory_space<vmem>>, vector<1x16x1xf32>
      tpu.vector_store %arg11[%c0_95, %c0_96, %c0_97], %157 {strides = array<i32>} : memref<1x16x1xf32, #tpu.memory_space<vmem>>, vector<1x16x1xf32>,
    } else {
    }
    return
  }
  func.func @transform_0(%arg0: i32) -> (i32, i32) {
    %c0_i32 = arith.constant 0 : i32
    %c0_i32_0 = arith.constant 0 : i32
    return %arg0, %c0_i32 : i32, i32
  }
  func.func @transform_1(%arg0: i32) -> (i32, i32) {
    %c0_i32 = arith.constant 0 : i32
    %c0_i32_0 = arith.constant 0 : i32
    %c0_i32_1 = arith.constant 0 : i32
    return %c0_i32, %c0_i32_0 : i32, i32
  }
  func.func @transform_2(%arg0: i32) -> (i32, i32) {
    %c0_i32 = arith.constant 0 : i32
    %c0_i32_0 = arith.constant 0 : i32
    %c0_i32_1 = arith.constant 0 : i32
    return %c0_i32, %c0_i32_0 : i32, i32
  }
  func.func @transform_3(%arg0: i32) -> (i32, i32) {
    %c0_i32 = arith.constant 0 : i32
    %c0_i32_0 = arith.constant 0 : i32
    %c0_i32_1 = arith.constant 0 : i32
    return %c0_i32, %c0_i32_0 : i32, i32
  }
  func.func @transform_4(%arg0: i32) -> (i32, i32) {
    %c0_i32 = arith.constant 0 : i32
    %c0_i32_0 = arith.constant 0 : i32
    %c0_i32_1 = arith.constant 0 : i32
    return %c0_i32, %c0_i32_0 : i32, i32
  }
  func.func @transform_5(%arg0: i32) -> (i32, i32) {
    %c0_i32 = arith.constant 0 : i32
    %c0_i32_0 = arith.constant 0 : i32
    %c0_i32_1 = arith.constant 0 : i32
    return %c0_i32, %c0_i32_0 : i32, i32
  }
  func.func @transform_6(%arg0: i32) -> (i32, i32) {
    %c0_i32 = arith.constant 0 : i32
    %c0_i32_0 = arith.constant 0 : i32
    %c0_i32_1 = arith.constant 0 : i32
    return %c0_i32, %c0_i32_0 : i32, i32
  }
  func.func @transform_7(%arg0: i32) -> (i32, i32) {
    %c0_i32 = arith.constant 0 : i32
    %c0_i32_0 = arith.constant 0 : i32
    %c0_i32_1 = arith.constant 0 : i32
    return %c0_i32, %c0_i32_0 : i32, i32
  }
  func.func @transform_8(%arg0: i32) -> (i32, i32) {
    %c0_i32 = arith.constant 0 : i32
    %c0_i32_0 = arith.constant 0 : i32
    %c0_i32_1 = arith.constant 0 : i32
    return %c0_i32, %c0_i32_0 : i32, i32
  }
  func.func @transform_9(%arg0: i32) -> (i32, i32) {
    %c0_i32 = arith.constant 0 : i32
    %c0_i32_0 = arith.constant 0 : i32
    %c0_i32_1 = arith.constant 0 : i32
    return %c0_i32, %c0_i32_0 : i32, i32
  }
  func.func @transform_10(%arg0: i32) -> (i32, i32, i32) {
    %c0_i32 = arith.constant 0 : i32
    %c0_i32_0 = arith.constant 0 : i32
    %c0_i32_1 = arith.constant 0 : i32
    %c0_i32_2 = arith.constant 0 : i32
    return %c0_i32, %c0_i32_0, %c0_i32_1 : i32, i32, i32
  }
}

</mosaic_0001>

<llo_original>
// kernel: discriminator_forward.1
$region0: #{discriminator_forward.1}
  #allocation0 [shape = 'u32[]', space=smem, size = 0x4, offset = 0x4, fixed_abs, tag = 'smem constant byte address 0x4 - core index']
  #allocation1 [shape = 'u32[72,128]{1,0:T(1,128)}', space=vmem, size = 0x9000, scoped, tag = 'internal scratch']
  #allocation2 [shape = 'bf16[1,16,512]{2,1,0:T(8,128)(2,1)}', space=vmem, size = 0x4000, scoped, tag = 'scratch operand']
  #allocation3 [shape = 'bf16[1,16,256]{2,1,0:T(8,128)(2,1)}', space=vmem, size = 0x2000, scoped, tag = 'scratch operand']
  #allocation4 [shape = 'f32[1,512]{1,0:T(1,128)}', space=vmem, size = 0x800, scoped, tag = 'scratch operand']
  #allocation5 [shape = 'f32[1,512]{1,0:T(1,128)}', space=vmem, size = 0x800, scoped, tag = 'scratch operand']
  #allocation6 [shape = 'f32[1,256]{1,0:T(1,128)}', space=vmem, size = 0x400, scoped, tag = 'scratch operand']
  #allocation7 [shape = 'f32[1,256]{1,0:T(1,128)}', space=vmem, size = 0x400, scoped, tag = 'scratch operand']
  #allocation8 [shape = 'f32[1,1]{1,0:T(1,128)S(1)}', space=vmem, size = 0x200, scoped, tag = 'scoped memory for discriminator_forward.1']
  #allocation9 [shape = 'f32[1,1]{1,0:T(1,128)S(1)}', space=vmem, size = 0x200, scoped, tag = 'scoped memory for discriminator_forward.1']
  %s0 = inlined_call_operand.hbm [shape: f32[16,768], index: 0, kind: input, shape index: {}]
  %s1 = inlined_call_operand.hbm [shape: bf16[768,512], index: 1, kind: input, shape index: {}]
  %s2 = inlined_call_operand.vmem [shape: f32[1,512], index: 2, kind: input, shape index: {}]
  %s3 = inlined_call_operand.hbm [shape: f32[1,512], index: 3, kind: input, shape index: {}]
  %s4 = inlined_call_operand.hbm [shape: bf16[512,256], index: 4, kind: input, shape index: {}]
  %s5 = inlined_call_operand.vmem [shape: f32[1,256], index: 5, kind: input, shape index: {}]
  %s6 = inlined_call_operand.hbm [shape: f32[1,256], index: 6, kind: input, shape index: {}]
  %s7 = inlined_call_operand.vmem [shape: bf16[1,256], index: 7, kind: input, shape index: {}]
  %s8 = inlined_call_operand.<no memory space> [shape: f32[1,1], index: 8, kind: input, shape index: {}]
  %s9 = inlined_call_operand.<no memory space> [shape: f32[1,1], index: 9, kind: input, shape index: {}]
  %s10 = inlined_call_operand.vmem [shape: f32[1,16,1], index: 10, kind: output, shape index: {}]
  %s11 = sld [smem:[#allocation0]]
  $region78: #{discriminator_forward.1} parent=0
    _
  %s13 = ssub.s32 1, %s11
  %s14 = scalar_select 0, %s13, %s11
  %v15 = vstv %s8
  %16 = vst [vmem:[#allocation8] sm:$0x1] %v15
  %v17 = vstv %s9
  %18 = vst [vmem:[#allocation9] sm:$0x1] %v17
  $region1: #{discriminator_forward.1} parent=0
    #allocation10 [shape = 'u8[49152]{0}', space=vmem, size = 0xc000, scoped, tag = 'input window, operand 0, single buffered']
    #allocation11 [shape = 's32[1]{0}', space=sflag, size = 0x4, scoped, tag = 'scoped memory for discriminator_forward.1']
    #allocation12 [shape = 'u8[786432]{0}', space=vmem, size = 0xc0000, scoped, tag = 'input window, operand 1, single buffered']
    #allocation13 [shape = 's32[1]{0}', space=sflag, size = 0x4, scoped, tag = 'scoped memory for discriminator_forward.1']
    #allocation14 [shape = 'u8[2048]{0}', space=vmem, size = 0x800, scoped, tag = 'input window, operand 3, single buffered']
    #allocation15 [shape = 'u8[262144]{0}', space=vmem, size = 0x40000, scoped, tag = 'input window, operand 4, single buffered']
    #allocation16 [shape = 's32[1]{0}', space=sflag, size = 0x4, scoped, tag = 'scoped memory for discriminator_forward.1']
    #allocation17 [shape = 'u8[1024]{0}', space=vmem, size = 0x400, scoped, tag = 'input window, operand 6, single buffered']
    %19 = vsyncpa [#allocation11], 0
    %20 = vsyncpa [#allocation13], 0
    %21 = vsyncpa [#allocation16], 0
    // Predicated region
    $region2: #{discriminator_forward.1} parent=1 // pred_check
      _
    $region3: #{discriminator_forward.1} parent=1 // pred_check_branch
      %23 = sbr.rel (0) target = $region5
    $region4: #{discriminator_forward.1} parent=1 // pred_region
      %25 = vsyncadd [#allocation11], 0
      %s26 = sshll.u32 %s0, 4
      %s27 = int_to_ptr.hbm [resolvable:$true] %s26
      %s28 = sshll.u32 [#allocation10], 4
      %s29 = int_to_ptr.vmem [resolvable:$true] %s28
      %34 = dma.hbm_to_vmem [thread:$0]  %s27, 1536, %s29, [#allocation11], 768, 768, 48
    $region5: #{discriminator_forward.1} parent=1 // pred_fallthru
      _
    // Predicated region
    $region6: #{discriminator_forward.1} parent=1 // pred_check
      _
    $region7: #{discriminator_forward.1} parent=1 // pred_check_branch
      %36 = sbr.rel (0) target = $region9
    $region8: #{discriminator_forward.1} parent=1 // pred_region
      %38 = vsyncadd [#allocation13], 0
      %s39 = sshll.u32 %s1, 4
      %s40 = int_to_ptr.hbm [resolvable:$true] %s39
      %s41 = sshll.u32 [#allocation12], 4
      %s42 = int_to_ptr.vmem [resolvable:$true] %s41
      %47 = dma.hbm_to_vmem [thread:$0]  %s40, 24576, %s42, [#allocation13], 256, 256, 16
    $region9: #{discriminator_forward.1} parent=1 // pred_fallthru
      _
    // Predicated region
    $region10: #{discriminator_forward.1} parent=1 // pred_check
      _
    $region11: #{discriminator_forward.1} parent=1 // pred_check_branch
      %49 = sbr.rel (0) target = $region13
    $region12: #{discriminator_forward.1} parent=1 // pred_region
      _
    $region13: #{discriminator_forward.1} parent=1 // pred_fallthru
      _
    // Predicated region
    $region14: #{discriminator_forward.1} parent=1 // pred_check
      _
    $region15: #{discriminator_forward.1} parent=1 // pred_check_branch
      %51 = sbr.rel (0) target = $region17
    $region16: #{discriminator_forward.1} parent=1 // pred_region
      %53 = vsyncadd [#allocation13], 0
      %s55 = sshll.u32 %s3, 4
      %s56 = int_to_ptr.hbm [resolvable:$true] %s55
      %s57 = sshll.u32 [#allocation14], 4
      %s58 = int_to_ptr.vmem [resolvable:$true] %s57
      %60 = dma.hbm_to_vmem [thread:$0]  %s56, 64, %s58, [#allocation13]
    $region17: #{discriminator_forward.1} parent=1 // pred_fallthru
      _
    // Predicated region
    $region18: #{discriminator_forward.1} parent=1 // pred_check
      _
    $region19: #{discriminator_forward.1} parent=1 // pred_check_branch
      %62 = sbr.rel (0) target = $region21
    $region20: #{discriminator_forward.1} parent=1 // pred_region
      %64 = vsyncadd [#allocation16], 0
      %s65 = sshll.u32 %s4, 4
      %s66 = int_to_ptr.hbm [resolvable:$true] %s65
      %s67 = sshll.u32 [#allocation15], 4
      %s68 = int_to_ptr.vmem [resolvable:$true] %s67
      %73 = dma.hbm_to_vmem [thread:$0]  %s66, 8192, %s68, [#allocation16], 128, 128, 8
    $region21: #{discriminator_forward.1} parent=1 // pred_fallthru
      _
    // Predicated region
    $region22: #{discriminator_forward.1} parent=1 // pred_check
      _
    $region23: #{discriminator_forward.1} parent=1 // pred_check_branch
      %75 = sbr.rel (0) target = $region25
    $region24: #{discriminator_forward.1} parent=1 // pred_region
      _
    $region25: #{discriminator_forward.1} parent=1 // pred_fallthru
      _
    // Predicated region
    $region26: #{discriminator_forward.1} parent=1 // pred_check
      _
    $region27: #{discriminator_forward.1} parent=1 // pred_check_branch
      %77 = sbr.rel (0) target = $region29
    $region28: #{discriminator_forward.1} parent=1 // pred_region
      %79 = vsyncadd [#allocation16], 0
      %s81 = sshll.u32 %s6, 4
      %s82 = int_to_ptr.hbm [resolvable:$true] %s81
      %s83 = sshll.u32 [#allocation17], 4
      %s84 = int_to_ptr.vmem [resolvable:$true] %s83
      %86 = dma.hbm_to_vmem [thread:$0]  %s82, 32, %s84, [#allocation16]
    $region29: #{discriminator_forward.1} parent=1 // pred_fallthru
      _
    // Predicated region
    $region30: #{discriminator_forward.1} parent=1 // pred_check
      _
    $region31: #{discriminator_forward.1} parent=1 // pred_check_branch
      %88 = sbr.rel (0) target = $region33
    $region32: #{discriminator_forward.1} parent=1 // pred_region
      _
    $region33: #{discriminator_forward.1} parent=1 // pred_fallthru
      _
    // Predicated region
    $region34: #{discriminator_forward.1} parent=1 // pred_check
      _
    $region35: #{discriminator_forward.1} parent=1 // pred_check_branch
      %90 = sbr.rel (0) target = $region37
    $region36: #{discriminator_forward.1} parent=1 // pred_region
      _
    $region37: #{discriminator_forward.1} parent=1 // pred_fallthru
      _
    // Predicated region
    $region38: #{discriminator_forward.1} parent=1 // pred_check
      _
    $region39: #{discriminator_forward.1} parent=1 // pred_check_branch
      %92 = sbr.rel (0) target = $region41
    $region40: #{discriminator_forward.1} parent=1 // pred_region
      _
    $region41: #{discriminator_forward.1} parent=1 // pred_fallthru
      _
    // Predicated region
    $region42: #{discriminator_forward.1} parent=1 // pred_check
      _
    $region43: #{discriminator_forward.1} parent=1 // pred_check_branch
      %94 = sbr.rel (0) target = $region45
    $region44: #{discriminator_forward.1} parent=1 // pred_region
      %96 = dma.done [#allocation11], 1536
    $region45: #{discriminator_forward.1} parent=1 // pred_fallthru
      _
    // Predicated region
    $region46: #{discriminator_forward.1} parent=1 // pred_check
      _
    $region47: #{discriminator_forward.1} parent=1 // pred_check_branch
      %98 = sbr.rel (0) target = $region49
    $region48: #{discriminator_forward.1} parent=1 // pred_region
      %100 = dma.done [#allocation13], 24576
    $region49: #{discriminator_forward.1} parent=1 // pred_fallthru
      _
    // Predicated region
    $region50: #{discriminator_forward.1} parent=1 // pred_check
      _
    $region51: #{discriminator_forward.1} parent=1 // pred_check_branch
      %102 = sbr.rel (0) target = $region53
    $region52: #{discriminator_forward.1} parent=1 // pred_region
      %104 = dma.done [#allocation13], 64
    $region53: #{discriminator_forward.1} parent=1 // pred_fallthru
      _
    // Predicated region
    $region54: #{discriminator_forward.1} parent=1 // pred_check
      _
    $region55: #{discriminator_forward.1} parent=1 // pred_check_branch
      %106 = sbr.rel (0) target = $region57
    $region56: #{discriminator_forward.1} parent=1 // pred_region
      %108 = dma.done [#allocation16], 8192
    $region57: #{discriminator_forward.1} parent=1 // pred_fallthru
      _
    // Predicated region
    $region58: #{discriminator_forward.1} parent=1 // pred_check
      _
    $region59: #{discriminator_forward.1} parent=1 // pred_check_branch
      %110 = sbr.rel (0) target = $region61
    $region60: #{discriminator_forward.1} parent=1 // pred_region
      %112 = dma.done [#allocation16], 32
    $region61: #{discriminator_forward.1} parent=1 // pred_fallthru
      _
    %p113 = scmp.eq.s32.totalorder 0, 0
    // Predicated region
    $region62: #{discriminator_forward.1} parent=1 // pred_check
      %p114 = pneg %p113
    $region63: #{discriminator_forward.1} parent=1 // pred_check_branch
      %116 = sbr.rel (%p114) target = $region65
    $region64: #{discriminator_forward.1} parent=1 // pred_region
      %v117 = vlaneseq
      %vm118 = vcmp.ge.s32.totalorder %v117, 0
      %vm119 = vcmp.lt.s32.totalorder %v117, 512
      %vm120 = vmand %vm118, %vm119
      %121 = vst.msk [vmem:[#allocation4] sm:$0xf] %vm120, 0.0
      %122 = vst.msk [vmem:[#allocation5] sm:$0xf] %vm120, 0.0
    $region65: #{discriminator_forward.1} parent=1 // pred_fallthru
      _
    %v123 = vld [vmem:[#allocation10] sm:$0xff]
    %v124 = vld [vmem:[#allocation10 + $0x8] sm:$0xff]
    %v125 = vld [vmem:[#allocation10 + $0x10] sm:$0xff]
    %v126 = vld [vmem:[#allocation10 + $0x18] sm:$0xff]
    %v127 = vld [vmem:[#allocation10 + $0x20] sm:$0xff]
    %v128 = vld [vmem:[#allocation10 + $0x28] sm:$0xff]
    %v129 = vld [vmem:[#allocation10 + $0x30] sm:$0xff]
    %v130 = vld [vmem:[#allocation10 + $0x38] sm:$0xff]
    %v131 = vld [vmem:[#allocation10 + $0x40] sm:$0xff]
    %v132 = vld [vmem:[#allocation10 + $0x48] sm:$0xff]
    %v133 = vld [vmem:[#allocation10 + $0x50] sm:$0xff]
    %v134 = vld [vmem:[#allocation10 + $0x58] sm:$0xff]
    %v135 = vpack.c.bf16 %v129, %v123
    %v136 = vpack.c.bf16 %v130, %v124
    %v137 = vpack.c.bf16 %v131, %v125
    %v138 = vpack.c.bf16 %v132, %v126
    %v139 = vpack.c.bf16 %v133, %v127
    %v140 = vpack.c.bf16 %v134, %v128
    %v141 = vld [vmem:[#allocation12] sm:$0xff]
    %v142 = vld [vmem:[#allocation12 + $0x8] sm:$0xff]
    %v143 = vld [vmem:[#allocation12 + $0x10] sm:$0xff]
    %v144 = vld [vmem:[#allocation12 + $0x18] sm:$0xff]
    %v145 = vld [vmem:[#allocation12 + $0x20] sm:$0xff]
    %v146 = vld [vmem:[#allocation12 + $0x28] sm:$0xff]
    %v147 = vld [vmem:[#allocation12 + $0x30] sm:$0xff]
    %v148 = vld [vmem:[#allocation12 + $0x38] sm:$0xff]
    %v149 = vld [vmem:[#allocation12 + $0x40] sm:$0xff]
    %v150 = vld [vmem:[#allocation12 + $0x48] sm:$0xff]
    %v151 = vld [vmem:[#allocation12 + $0x50] sm:$0xff]
    %v152 = vld [vmem:[#allocation12 + $0x58] sm:$0xff]
    %v153 = vld [vmem:[#allocation12 + $0x60] sm:$0xff]
    %v154 = vld [vmem:[#allocation12 + $0x68] sm:$0xff]
    %v155 = vld [vmem:[#allocation12 + $0x70] sm:$0xff]
    %v156 = vld [vmem:[#allocation12 + $0x78] sm:$0xff]
    %v157 = vld [vmem:[#allocation12 + $0x80] sm:$0xff]
    %v158 = vld [vmem:[#allocation12 + $0x88] sm:$0xff]
    %v159 = vld [vmem:[#allocation12 + $0x90] sm:$0xff]
    %v160 = vld [vmem:[#allocation12 + $0x98] sm:$0xff]
    %v161 = vld [vmem:[#allocation12 + $0xa0] sm:$0xff]
    %v162 = vld [vmem:[#allocation12 + $0xa8] sm:$0xff]
    %v163 = vld [vmem:[#allocation12 + $0xb0] sm:$0xff]
    %v164 = vld [vmem:[#allocation12 + $0xb8] sm:$0xff]
    %v165 = vld [vmem:[#allocation12 + $0xc0] sm:$0xff]
    %v166 = vld [vmem:[#allocation12 + $0xc8] sm:$0xff]
    %v167 = vld [vmem:[#allocation12 + $0xd0] sm:$0xff]
    %v168 = vld [vmem:[#allocation12 + $0xd8] sm:$0xff]
    %v169 = vld [vmem:[#allocation12 + $0xe0] sm:$0xff]
    %v170 = vld [vmem:[#allocation12 + $0xe8] sm:$0xff]
    %v171 = vld [vmem:[#allocation12 + $0xf0] sm:$0xff]
    %v172 = vld [vmem:[#allocation12 + $0xf8] sm:$0xff]
    %v173 = vld [vmem:[#allocation12 + $0x100] sm:$0xff]
    %v174 = vld [vmem:[#allocation12 + $0x108] sm:$0xff]
    %v175 = vld [vmem:[#allocation12 + $0x110] sm:$0xff]
    %v176 = vld [vmem:[#allocation12 + $0x118] sm:$0xff]
    %v177 = vld [vmem:[#allocation12 + $0x120] sm:$0xff]
    %v178 = vld [vmem:[#allocation12 + $0x128] sm:$0xff]
    %v179 = vld [vmem:[#allocation12 + $0x130] sm:$0xff]
    %v180 = vld [vmem:[#allocation12 + $0x138] sm:$0xff]
    %v181 = vld [vmem:[#allocation12 + $0x140] sm:$0xff]
    %v182 = vld [vmem:[#allocation12 + $0x148] sm:$0xff]
    %v183 = vld [vmem:[#allocation12 + $0x150] sm:$0xff]
    %v184 = vld [vmem:[#allocation12 + $0x158] sm:$0xff]
    %v185 = vld [vmem:[#allocation12 + $0x160] sm:$0xff]
    %v186 = vld [vmem:[#allocation12 + $0x168] sm:$0xff]
    %v187 = vld [vmem:[#allocation12 + $0x170] sm:$0xff]
    %v188 = vld [vmem:[#allocation12 + $0x178] sm:$0xff]
    %v189 = vld [vmem:[#allocation12 + $0x180] sm:$0xff]
    %v190 = vld [vmem:[#allocation12 + $0x188] sm:$0xff]
    %v191 = vld [vmem:[#allocation12 + $0x190] sm:$0xff]
    %v192 = vld [vmem:[#allocation12 + $0x198] sm:$0xff]
    %v193 = vld [vmem:[#allocation12 + $0x1a0] sm:$0xff]
    %v194 = vld [vmem:[#allocation12 + $0x1a8] sm:$0xff]
    %v195 = vld [vmem:[#allocation12 + $0x1b0] sm:$0xff]
    %v196 = vld [vmem:[#allocation12 + $0x1b8] sm:$0xff]
    %v197 = vld [vmem:[#allocation12 + $0x1c0] sm:$0xff]
    %v198 = vld [vmem:[#allocation12 + $0x1c8] sm:$0xff]
    %v199 = vld [vmem:[#allocation12 + $0x1d0] sm:$0xff]
    %v200 = vld [vmem:[#allocation12 + $0x1d8] sm:$0xff]
    %v201 = vld [vmem:[#allocation12 + $0x1e0] sm:$0xff]
    %v202 = vld [vmem:[#allocation12 + $0x1e8] sm:$0xff]
    %v203 = vld [vmem:[#allocation12 + $0x1f0] sm:$0xff]
    %v204 = vld [vmem:[#allocation12 + $0x1f8] sm:$0xff]
    %v205 = vld [vmem:[#allocation12 + $0x200] sm:$0xff]
    %v206 = vld [vmem:[#allocation12 + $0x208] sm:$0xff]
    %v207 = vld [vmem:[#allocation12 + $0x210] sm:$0xff]
    %v208 = vld [vmem:[#allocation12 + $0x218] sm:$0xff]
    %v209 = vld [vmem:[#allocation12 + $0x220] sm:$0xff]
    %v210 = vld [vmem:[#allocation12 + $0x228] sm:$0xff]
    %v211 = vld [vmem:[#allocation12 + $0x230] sm:$0xff]
    %v212 = vld [vmem:[#allocation12 + $0x238] sm:$0xff]
    %v213 = vld [vmem:[#allocation12 + $0x240] sm:$0xff]
    %v214 = vld [vmem:[#allocation12 + $0x248] sm:$0xff]
    %v215 = vld [vmem:[#allocation12 + $0x250] sm:$0xff]
    %v216 = vld [vmem:[#allocation12 + $0x258] sm:$0xff]
    %v217 = vld [vmem:[#allocation12 + $0x260] sm:$0xff]
    %v218 = vld [vmem:[#allocation12 + $0x268] sm:$0xff]
    %v219 = vld [vmem:[#allocation12 + $0x270] sm:$0xff]
    %v220 = vld [vmem:[#allocation12 + $0x278] sm:$0xff]
    %v221 = vld [vmem:[#allocation12 + $0x280] sm:$0xff]
    %v222 = vld [vmem:[#allocation12 + $0x288] sm:$0xff]
    %v223 = vld [vmem:[#allocation12 + $0x290] sm:$0xff]
    %v224 = vld [vmem:[#allocation12 + $0x298] sm:$0xff]
    %v225 = vld [vmem:[#allocation12 + $0x2a0] sm:$0xff]
    %v226 = vld [vmem:[#allocation12 + $0x2a8] sm:$0xff]
    %v227 = vld [vmem:[#allocation12 + $0x2b0] sm:$0xff]
    %v228 = vld [vmem:[#allocation12 + $0x2b8] sm:$0xff]
    %v229 = vld [vmem:[#allocation12 + $0x2c0] sm:$0xff]
    %v230 = vld [vmem:[#allocation12 + $0x2c8] sm:$0xff]
    %v231 = vld [vmem:[#allocation12 + $0x2d0] sm:$0xff]
    %v232 = vld [vmem:[#allocation12 + $0x2d8] sm:$0xff]
    %v233 = vld [vmem:[#allocation12 + $0x2e0] sm:$0xff]
    %v234 = vld [vmem:[#allocation12 + $0x2e8] sm:$0xff]
    %v235 = vld [vmem:[#allocation12 + $0x2f0] sm:$0xff]
    %v236 = vld [vmem:[#allocation12 + $0x2f8] sm:$0xff]
    %v237 = vld [vmem:[#allocation12 + $0x300] sm:$0xff]
    %v238 = vld [vmem:[#allocation12 + $0x308] sm:$0xff]
    %v239 = vld [vmem:[#allocation12 + $0x310] sm:$0xff]
    %v240 = vld [vmem:[#allocation12 + $0x318] sm:$0xff]
    %v241 = vld [vmem:[#allocation12 + $0x320] sm:$0xff]
    %v242 = vld [vmem:[#allocation12 + $0x328] sm:$0xff]
    %v243 = vld [vmem:[#allocation12 + $0x330] sm:$0xff]
    %v244 = vld [vmem:[#allocation12 + $0x338] sm:$0xff]
    %v245 = vld [vmem:[#allocation12 + $0x340] sm:$0xff]
    %v246 = vld [vmem:[#allocation12 + $0x348] sm:$0xff]
    %v247 = vld [vmem:[#allocation12 + $0x350] sm:$0xff]
    %v248 = vld [vmem:[#allocation12 + $0x358] sm:$0xff]
    %v249 = vld [vmem:[#allocation12 + $0x360] sm:$0xff]
    %v250 = vld [vmem:[#allocation12 + $0x368] sm:$0xff]
    %v251 = vld [vmem:[#allocation12 + $0x370] sm:$0xff]
    %v252 = vld [vmem:[#allocation12 + $0x378] sm:$0xff]
    %v253 = vld [vmem:[#allocation12 + $0x380] sm:$0xff]
    %v254 = vld [vmem:[#allocation12 + $0x388] sm:$0xff]
    %v255 = vld [vmem:[#allocation12 + $0x390] sm:$0xff]
    %v256 = vld [vmem:[#allocation12 + $0x398] sm:$0xff]
    %v257 = vld [vmem:[#allocation12 + $0x3a0] sm:$0xff]
    %v258 = vld [vmem:[#allocation12 + $0x3a8] sm:$0xff]
    %v259 = vld [vmem:[#allocation12 + $0x3b0] sm:$0xff]
    %v260 = vld [vmem:[#allocation12 + $0x3b8] sm:$0xff]
    %v261 = vld [vmem:[#allocation12 + $0x3c0] sm:$0xff]
    %v262 = vld [vmem:[#allocation12 + $0x3c8] sm:$0xff]
    %v263 = vld [vmem:[#allocation12 + $0x3d0] sm:$0xff]
    %v264 = vld [vmem:[#allocation12 + $0x3d8] sm:$0xff]
    %v265 = vld [vmem:[#allocation12 + $0x3e0] sm:$0xff]
    %v266 = vld [vmem:[#allocation12 + $0x3e8] sm:$0xff]
    %v267 = vld [vmem:[#allocation12 + $0x3f0] sm:$0xff]
    %v268 = vld [vmem:[#allocation12 + $0x3f8] sm:$0xff]
    %v269 = vld [vmem:[#allocation12 + $0x400] sm:$0xff]
    %v270 = vld [vmem:[#allocation12 + $0x408] sm:$0xff]
    %v271 = vld [vmem:[#allocation12 + $0x410] sm:$0xff]
    %v272 = vld [vmem:[#allocation12 + $0x418] sm:$0xff]
    %v273 = vld [vmem:[#allocation12 + $0x420] sm:$0xff]
    %v274 = vld [vmem:[#allocation12 + $0x428] sm:$0xff]
    %v275 = vld [vmem:[#allocation12 + $0x430] sm:$0xff]
    %v276 = vld [vmem:[#allocation12 + $0x438] sm:$0xff]
    %v277 = vld [vmem:[#allocation12 + $0x440] sm:$0xff]
    %v278 = vld [vmem:[#allocation12 + $0x448] sm:$0xff]
    %v279 = vld [vmem:[#allocation12 + $0x450] sm:$0xff]
    %v280 = vld [vmem:[#allocation12 + $0x458] sm:$0xff]
    %v281 = vld [vmem:[#allocation12 + $0x460] sm:$0xff]
    %v282 = vld [vmem:[#allocation12 + $0x468] sm:$0xff]
    %v283 = vld [vmem:[#allocation12 + $0x470] sm:$0xff]
    %v284 = vld [vmem:[#allocation12 + $0x478] sm:$0xff]
    %v285 = vld [vmem:[#allocation12 + $0x480] sm:$0xff]
    %v286 = vld [vmem:[#allocation12 + $0x488] sm:$0xff]
    %v287 = vld [vmem:[#allocation12 + $0x490] sm:$0xff]
    %v288 = vld [vmem:[#allocation12 + $0x498] sm:$0xff]
    %v289 = vld [vmem:[#allocation12 + $0x4a0] sm:$0xff]
    %v290 = vld [vmem:[#allocation12 + $0x4a8] sm:$0xff]
    %v291 = vld [vmem:[#allocation12 + $0x4b0] sm:$0xff]
    %v292 = vld [vmem:[#allocation12 + $0x4b8] sm:$0xff]
    %v293 = vld [vmem:[#allocation12 + $0x4c0] sm:$0xff]
    %v294 = vld [vmem:[#allocation12 + $0x4c8] sm:$0xff]
    %v295 = vld [vmem:[#allocation12 + $0x4d0] sm:$0xff]
    %v296 = vld [vmem:[#allocation12 + $0x4d8] sm:$0xff]
    %v297 = vld [vmem:[#allocation12 + $0x4e0] sm:$0xff]
    %v298 = vld [vmem:[#allocation12 + $0x4e8] sm:$0xff]
    %v299 = vld [vmem:[#allocation12 + $0x4f0] sm:$0xff]
    %v300 = vld [vmem:[#allocation12 + $0x4f8] sm:$0xff]
    %v301 = vld [vmem:[#allocation12 + $0x500] sm:$0xff]
    %v302 = vld [vmem:[#allocation12 + $0x508] sm:$0xff]
    %v303 = vld [vmem:[#allocation12 + $0x510] sm:$0xff]
    %v304 = vld [vmem:[#allocation12 + $0x518] sm:$0xff]
    %v305 = vld [vmem:[#allocation12 + $0x520] sm:$0xff]
    %v306 = vld [vmem:[#allocation12 + $0x528] sm:$0xff]
    %v307 = vld [vmem:[#allocation12 + $0x530] sm:$0xff]
    %v308 = vld [vmem:[#allocation12 + $0x538] sm:$0xff]
    %v309 = vld [vmem:[#allocation12 + $0x540] sm:$0xff]
    %v310 = vld [vmem:[#allocation12 + $0x548] sm:$0xff]
    %v311 = vld [vmem:[#allocation12 + $0x550] sm:$0xff]
    %v312 = vld [vmem:[#allocation12 + $0x558] sm:$0xff]
    %v313 = vld [vmem:[#allocation12 + $0x560] sm:$0xff]
    %v314 = vld [vmem:[#allocation12 + $0x568] sm:$0xff]
    %v315 = vld [vmem:[#allocation12 + $0x570] sm:$0xff]
    %v316 = vld [vmem:[#allocation12 + $0x578] sm:$0xff]
    %v317 = vld [vmem:[#allocation12 + $0x580] sm:$0xff]
    %v318 = vld [vmem:[#allocation12 + $0x588] sm:$0xff]
    %v319 = vld [vmem:[#allocation12 + $0x590] sm:$0xff]
    %v320 = vld [vmem:[#allocation12 + $0x598] sm:$0xff]
    %v321 = vld [vmem:[#allocation12 + $0x5a0] sm:$0xff]
    %v322 = vld [vmem:[#allocation12 + $0x5a8] sm:$0xff]
    %v323 = vld [vmem:[#allocation12 + $0x5b0] sm:$0xff]
    %v324 = vld [vmem:[#allocation12 + $0x5b8] sm:$0xff]
    %v325 = vld [vmem:[#allocation12 + $0x5c0] sm:$0xff]
    %v326 = vld [vmem:[#allocation12 + $0x5c8] sm:$0xff]
    %v327 = vld [vmem:[#allocation12 + $0x5d0] sm:$0xff]
    %v328 = vld [vmem:[#allocation12 + $0x5d8] sm:$0xff]
    %v329 = vld [vmem:[#allocation12 + $0x5e0] sm:$0xff]
    %v330 = vld [vmem:[#allocation12 + $0x5e8] sm:$0xff]
    %v331 = vld [vmem:[#allocation12 + $0x5f0] sm:$0xff]
    %v332 = vld [vmem:[#allocation12 + $0x5f8] sm:$0xff]
    %v525 = vunpack.c.l.b16 %v141
    %v526 = vunpack.c.h.b16 %v141
    %v527 = vunpack.c.l.b16 %v142
    %v528 = vunpack.c.h.b16 %v142
    %v529 = vunpack.c.l.b16 %v143
    %v530 = vunpack.c.h.b16 %v143
    %v531 = vunpack.c.l.b16 %v144
    %v532 = vunpack.c.h.b16 %v144
    %v533 = vunpack.c.l.b16 %v145
    %v534 = vunpack.c.h.b16 %v145
    %v535 = vunpack.c.l.b16 %v146
    %v536 = vunpack.c.h.b16 %v146
    %v537 = vunpack.c.l.b16 %v147
    %v538 = vunpack.c.h.b16 %v147
    %v539 = vunpack.c.l.b16 %v148
    %v540 = vunpack.c.h.b16 %v148
    %v541 = vunpack.c.l.b16 %v149
    %v542 = vunpack.c.h.b16 %v149
    %v543 = vunpack.c.l.b16 %v150
    %v544 = vunpack.c.h.b16 %v150
    %v545 = vunpack.c.l.b16 %v151
    %v546 = vunpack.c.h.b16 %v151
    %v547 = vunpack.c.l.b16 %v152
    %v548 = vunpack.c.h.b16 %v152
    %v549 = vunpack.c.l.b16 %v153
    %v550 = vunpack.c.h.b16 %v153
    %v551 = vunpack.c.l.b16 %v154
    %v552 = vunpack.c.h.b16 %v154
    %v553 = vunpack.c.l.b16 %v155
    %v554 = vunpack.c.h.b16 %v155
    %v555 = vunpack.c.l.b16 %v156
    %v556 = vunpack.c.h.b16 %v156
    %v557 = vunpack.c.l.b16 %v157
    %v558 = vunpack.c.h.b16 %v157
    %v559 = vunpack.c.l.b16 %v158
    %v560 = vunpack.c.h.b16 %v158
    %v561 = vunpack.c.l.b16 %v159
    %v562 = vunpack.c.h.b16 %v159
    %v563 = vunpack.c.l.b16 %v160
    %v564 = vunpack.c.h.b16 %v160
    %v565 = vunpack.c.l.b16 %v161
    %v566 = vunpack.c.h.b16 %v161
    %v567 = vunpack.c.l.b16 %v162
    %v568 = vunpack.c.h.b16 %v162
    %v569 = vunpack.c.l.b16 %v163
    %v570 = vunpack.c.h.b16 %v163
    %v571 = vunpack.c.l.b16 %v164
    %v572 = vunpack.c.h.b16 %v164
    %v573 = vunpack.c.l.b16 %v165
    %v574 = vunpack.c.h.b16 %v165
    %v575 = vunpack.c.l.b16 %v166
    %v576 = vunpack.c.h.b16 %v166
    %v577 = vunpack.c.l.b16 %v167
    %v578 = vunpack.c.h.b16 %v167
    %v579 = vunpack.c.l.b16 %v168
    %v580 = vunpack.c.h.b16 %v168
    %v581 = vunpack.c.l.b16 %v169
    %v582 = vunpack.c.h.b16 %v169
    %v583 = vunpack.c.l.b16 %v170
    %v584 = vunpack.c.h.b16 %v170
    %v585 = vunpack.c.l.b16 %v171
    %v586 = vunpack.c.h.b16 %v171
    %v587 = vunpack.c.l.b16 %v172
    %v588 = vunpack.c.h.b16 %v172
    %v589 = vunpack.c.l.b16 %v173
    %v590 = vunpack.c.h.b16 %v173
    %v591 = vunpack.c.l.b16 %v174
    %v592 = vunpack.c.h.b16 %v174
    %v593 = vunpack.c.l.b16 %v175
    %v594 = vunpack.c.h.b16 %v175
    %v595 = vunpack.c.l.b16 %v176
    %v596 = vunpack.c.h.b16 %v176
    %v597 = vunpack.c.l.b16 %v177
    %v598 = vunpack.c.h.b16 %v177
    %v599 = vunpack.c.l.b16 %v178
    %v600 = vunpack.c.h.b16 %v178
    %v601 = vunpack.c.l.b16 %v179
    %v602 = vunpack.c.h.b16 %v179
    %v603 = vunpack.c.l.b16 %v180
    %v604 = vunpack.c.h.b16 %v180
    %v605 = vunpack.c.l.b16 %v181
    %v606 = vunpack.c.h.b16 %v181
    %v607 = vunpack.c.l.b16 %v182
    %v608 = vunpack.c.h.b16 %v182
    %v609 = vunpack.c.l.b16 %v183
    %v610 = vunpack.c.h.b16 %v183
    %v611 = vunpack.c.l.b16 %v184
    %v612 = vunpack.c.h.b16 %v184
    %v613 = vunpack.c.l.b16 %v185
    %v614 = vunpack.c.h.b16 %v185
    %v615 = vunpack.c.l.b16 %v186
    %v616 = vunpack.c.h.b16 %v186
    %v617 = vunpack.c.l.b16 %v187
    %v618 = vunpack.c.h.b16 %v187
    %v619 = vunpack.c.l.b16 %v188
    %v620 = vunpack.c.h.b16 %v188
    %v621 = vunpack.c.l.b16 %v189
    %v622 = vunpack.c.h.b16 %v189
    %v623 = vunpack.c.l.b16 %v190
    %v624 = vunpack.c.h.b16 %v190
    %v625 = vunpack.c.l.b16 %v191
    %v626 = vunpack.c.h.b16 %v191
    %v627 = vunpack.c.l.b16 %v192
    %v628 = vunpack.c.h.b16 %v192
    %v629 = vunpack.c.l.b16 %v193
    %v630 = vunpack.c.h.b16 %v193
    %v631 = vunpack.c.l.b16 %v194
    %v632 = vunpack.c.h.b16 %v194
    %v633 = vunpack.c.l.b16 %v195
    %v634 = vunpack.c.h.b16 %v195
    %v635 = vunpack.c.l.b16 %v196
    %v636 = vunpack.c.h.b16 %v196
    %v637 = vunpack.c.l.b16 %v197
    %v638 = vunpack.c.h.b16 %v197
    %v639 = vunpack.c.l.b16 %v198
    %v640 = vunpack.c.h.b16 %v198
    %v641 = vunpack.c.l.b16 %v199
    %v642 = vunpack.c.h.b16 %v199
    %v643 = vunpack.c.l.b16 %v200
    %v644 = vunpack.c.h.b16 %v200
    %v645 = vunpack.c.l.b16 %v201
    %v646 = vunpack.c.h.b16 %v201
    %v647 = vunpack.c.l.b16 %v202
    %v648 = vunpack.c.h.b16 %v202
    %v649 = vunpack.c.l.b16 %v203
    %v650 = vunpack.c.h.b16 %v203
    %v651 = vunpack.c.l.b16 %v204
    %v652 = vunpack.c.h.b16 %v204
    %v653 = vunpack.c.l.b16 %v205
    %v654 = vunpack.c.h.b16 %v205
    %v655 = vunpack.c.l.b16 %v206
    %v656 = vunpack.c.h.b16 %v206
    %v657 = vunpack.c.l.b16 %v207
    %v658 = vunpack.c.h.b16 %v207
    %v659 = vunpack.c.l.b16 %v208
    %v660 = vunpack.c.h.b16 %v208
    %v661 = vunpack.c.l.b16 %v209
    %v662 = vunpack.c.h.b16 %v209
    %v663 = vunpack.c.l.b16 %v210
    %v664 = vunpack.c.h.b16 %v210
    %v665 = vunpack.c.l.b16 %v211
    %v666 = vunpack.c.h.b16 %v211
    %v667 = vunpack.c.l.b16 %v212
    %v668 = vunpack.c.h.b16 %v212
    %v669 = vunpack.c.l.b16 %v213
    %v670 = vunpack.c.h.b16 %v213
    %v671 = vunpack.c.l.b16 %v214
    %v672 = vunpack.c.h.b16 %v214
    %v673 = vunpack.c.l.b16 %v215
    %v674 = vunpack.c.h.b16 %v215
    %v675 = vunpack.c.l.b16 %v216
    %v676 = vunpack.c.h.b16 %v216
    %v677 = vunpack.c.l.b16 %v217
    %v678 = vunpack.c.h.b16 %v217
    %v679 = vunpack.c.l.b16 %v218
    %v680 = vunpack.c.h.b16 %v218
    %v681 = vunpack.c.l.b16 %v219
    %v682 = vunpack.c.h.b16 %v219
    %v683 = vunpack.c.l.b16 %v220
    %v684 = vunpack.c.h.b16 %v220
    %v685 = vunpack.c.l.b16 %v221
    %v686 = vunpack.c.h.b16 %v221
    %v687 = vunpack.c.l.b16 %v222
    %v688 = vunpack.c.h.b16 %v222
    %v689 = vunpack.c.l.b16 %v223
    %v690 = vunpack.c.h.b16 %v223
    %v691 = vunpack.c.l.b16 %v224
    %v692 = vunpack.c.h.b16 %v224
    %v693 = vunpack.c.l.b16 %v225
    %v694 = vunpack.c.h.b16 %v225
    %v695 = vunpack.c.l.b16 %v226
    %v696 = vunpack.c.h.b16 %v226
    %v697 = vunpack.c.l.b16 %v227
    %v698 = vunpack.c.h.b16 %v227
    %v699 = vunpack.c.l.b16 %v228
    %v700 = vunpack.c.h.b16 %v228
    %v701 = vunpack.c.l.b16 %v229
    %v702 = vunpack.c.h.b16 %v229
    %v703 = vunpack.c.l.b16 %v230
    %v704 = vunpack.c.h.b16 %v230
    %v705 = vunpack.c.l.b16 %v231
    %v706 = vunpack.c.h.b16 %v231
    %v707 = vunpack.c.l.b16 %v232
    %v708 = vunpack.c.h.b16 %v232
    %v709 = vunpack.c.l.b16 %v233
    %v710 = vunpack.c.h.b16 %v233
    %v711 = vunpack.c.l.b16 %v234
    %v712 = vunpack.c.h.b16 %v234
    %v713 = vunpack.c.l.b16 %v235
    %v714 = vunpack.c.h.b16 %v235
    %v715 = vunpack.c.l.b16 %v236
    %v716 = vunpack.c.h.b16 %v236
    %v717 = vunpack.c.l.b16 %v237
    %v718 = vunpack.c.h.b16 %v237
    %v719 = vunpack.c.l.b16 %v238
    %v720 = vunpack.c.h.b16 %v238
    %v721 = vunpack.c.l.b16 %v239
    %v722 = vunpack.c.h.b16 %v239
    %v723 = vunpack.c.l.b16 %v240
    %v724 = vunpack.c.h.b16 %v240
    %v725 = vunpack.c.l.b16 %v241
    %v726 = vunpack.c.h.b16 %v241
    %v727 = vunpack.c.l.b16 %v242
    %v728 = vunpack.c.h.b16 %v242
    %v729 = vunpack.c.l.b16 %v243
    %v730 = vunpack.c.h.b16 %v243
    %v731 = vunpack.c.l.b16 %v244
    %v732 = vunpack.c.h.b16 %v244
    %v733 = vunpack.c.l.b16 %v245
    %v734 = vunpack.c.h.b16 %v245
    %v735 = vunpack.c.l.b16 %v246
    %v736 = vunpack.c.h.b16 %v246
    %v737 = vunpack.c.l.b16 %v247
    %v738 = vunpack.c.h.b16 %v247
    %v739 = vunpack.c.l.b16 %v248
    %v740 = vunpack.c.h.b16 %v248
    %v741 = vunpack.c.l.b16 %v249
    %v742 = vunpack.c.h.b16 %v249
    %v743 = vunpack.c.l.b16 %v250
    %v744 = vunpack.c.h.b16 %v250
    %v745 = vunpack.c.l.b16 %v251
    %v746 = vunpack.c.h.b16 %v251
    %v747 = vunpack.c.l.b16 %v252
    %v748 = vunpack.c.h.b16 %v252
    %v749 = vunpack.c.l.b16 %v253
    %v750 = vunpack.c.h.b16 %v253
    %v751 = vunpack.c.l.b16 %v254
    %v752 = vunpack.c.h.b16 %v254
    %v753 = vunpack.c.l.b16 %v255
    %v754 = vunpack.c.h.b16 %v255
    %v755 = vunpack.c.l.b16 %v256
    %v756 = vunpack.c.h.b16 %v256
    %v757 = vunpack.c.l.b16 %v257
    %v758 = vunpack.c.h.b16 %v257
    %v759 = vunpack.c.l.b16 %v258
    %v760 = vunpack.c.h.b16 %v258
    %v761 = vunpack.c.l.b16 %v259
    %v762 = vunpack.c.h.b16 %v259
    %v763 = vunpack.c.l.b16 %v260
    %v764 = vunpack.c.h.b16 %v260
    %v765 = vunpack.c.l.b16 %v261
    %v766 = vunpack.c.h.b16 %v261
    %v767 = vunpack.c.l.b16 %v262
    %v768 = vunpack.c.h.b16 %v262
    %v769 = vunpack.c.l.b16 %v263
    %v770 = vunpack.c.h.b16 %v263
    %v771 = vunpack.c.l.b16 %v264
    %v772 = vunpack.c.h.b16 %v264
    %v773 = vunpack.c.l.b16 %v265
    %v774 = vunpack.c.h.b16 %v265
    %v775 = vunpack.c.l.b16 %v266
    %v776 = vunpack.c.h.b16 %v266
    %v777 = vunpack.c.l.b16 %v267
    %v778 = vunpack.c.h.b16 %v267
    %v779 = vunpack.c.l.b16 %v268
    %v780 = vunpack.c.h.b16 %v268
    %v781 = vunpack.c.l.b16 %v269
    %v782 = vunpack.c.h.b16 %v269
    %v783 = vunpack.c.l.b16 %v270
    %v784 = vunpack.c.h.b16 %v270
    %v785 = vunpack.c.l.b16 %v271
    %v786 = vunpack.c.h.b16 %v271
    %v787 = vunpack.c.l.b16 %v272
    %v788 = vunpack.c.h.b16 %v272
    %v789 = vunpack.c.l.b16 %v273
    %v790 = vunpack.c.h.b16 %v273
    %v791 = vunpack.c.l.b16 %v274
    %v792 = vunpack.c.h.b16 %v274
    %v793 = vunpack.c.l.b16 %v275
    %v794 = vunpack.c.h.b16 %v275
    %v795 = vunpack.c.l.b16 %v276
    %v796 = vunpack.c.h.b16 %v276
    %v797 = vunpack.c.l.b16 %v277
    %v798 = vunpack.c.h.b16 %v277
    %v799 = vunpack.c.l.b16 %v278
    %v800 = vunpack.c.h.b16 %v278
    %v801 = vunpack.c.l.b16 %v279
    %v802 = vunpack.c.h.b16 %v279
    %v803 = vunpack.c.l.b16 %v280
    %v804 = vunpack.c.h.b16 %v280
    %v805 = vunpack.c.l.b16 %v281
    %v806 = vunpack.c.h.b16 %v281
    %v807 = vunpack.c.l.b16 %v282
    %v808 = vunpack.c.h.b16 %v282
    %v809 = vunpack.c.l.b16 %v283
    %v810 = vunpack.c.h.b16 %v283
    %v811 = vunpack.c.l.b16 %v284
    %v812 = vunpack.c.h.b16 %v284
    %v813 = vunpack.c.l.b16 %v285
    %v814 = vunpack.c.h.b16 %v285
    %v815 = vunpack.c.l.b16 %v286
    %v816 = vunpack.c.h.b16 %v286
    %v817 = vunpack.c.l.b16 %v287
    %v818 = vunpack.c.h.b16 %v287
    %v819 = vunpack.c.l.b16 %v288
    %v820 = vunpack.c.h.b16 %v288
    %v821 = vunpack.c.l.b16 %v289
    %v822 = vunpack.c.h.b16 %v289
    %v823 = vunpack.c.l.b16 %v290
    %v824 = vunpack.c.h.b16 %v290
    %v825 = vunpack.c.l.b16 %v291
    %v826 = vunpack.c.h.b16 %v291
    %v827 = vunpack.c.l.b16 %v292
    %v828 = vunpack.c.h.b16 %v292
    %v829 = vunpack.c.l.b16 %v293
    %v830 = vunpack.c.h.b16 %v293
    %v831 = vunpack.c.l.b16 %v294
    %v832 = vunpack.c.h.b16 %v294
    %v833 = vunpack.c.l.b16 %v295
    %v834 = vunpack.c.h.b16 %v295
    %v835 = vunpack.c.l.b16 %v296
    %v836 = vunpack.c.h.b16 %v296
    %v837 = vunpack.c.l.b16 %v297
    %v838 = vunpack.c.h.b16 %v297
    %v839 = vunpack.c.l.b16 %v298
    %v840 = vunpack.c.h.b16 %v298
    %v841 = vunpack.c.l.b16 %v299
    %v842 = vunpack.c.h.b16 %v299
    %v843 = vunpack.c.l.b16 %v300
    %v844 = vunpack.c.h.b16 %v300
    %v845 = vunpack.c.l.b16 %v301
    %v846 = vunpack.c.h.b16 %v301
    %v847 = vunpack.c.l.b16 %v302
    %v848 = vunpack.c.h.b16 %v302
    %v849 = vunpack.c.l.b16 %v303
    %v850 = vunpack.c.h.b16 %v303
    %v851 = vunpack.c.l.b16 %v304
    %v852 = vunpack.c.h.b16 %v304
    %v853 = vunpack.c.l.b16 %v305
    %v854 = vunpack.c.h.b16 %v305
    %v855 = vunpack.c.l.b16 %v306
    %v856 = vunpack.c.h.b16 %v306
    %v857 = vunpack.c.l.b16 %v307
    %v858 = vunpack.c.h.b16 %v307
    %v859 = vunpack.c.l.b16 %v308
    %v860 = vunpack.c.h.b16 %v308
    %v861 = vunpack.c.l.b16 %v309
    %v862 = vunpack.c.h.b16 %v309
    %v863 = vunpack.c.l.b16 %v310
    %v864 = vunpack.c.h.b16 %v310
    %v865 = vunpack.c.l.b16 %v311
    %v866 = vunpack.c.h.b16 %v311
    %v867 = vunpack.c.l.b16 %v312
    %v868 = vunpack.c.h.b16 %v312
    %v869 = vunpack.c.l.b16 %v313
    %v870 = vunpack.c.h.b16 %v313
    %v871 = vunpack.c.l.b16 %v314
    %v872 = vunpack.c.h.b16 %v314
    %v873 = vunpack.c.l.b16 %v315
    %v874 = vunpack.c.h.b16 %v315
    %v875 = vunpack.c.l.b16 %v316
    %v876 = vunpack.c.h.b16 %v316
    %v877 = vunpack.c.l.b16 %v317
    %v878 = vunpack.c.h.b16 %v317
    %v879 = vunpack.c.l.b16 %v318
    %v880 = vunpack.c.h.b16 %v318
    %v881 = vunpack.c.l.b16 %v319
    %v882 = vunpack.c.h.b16 %v319
    %v883 = vunpack.c.l.b16 %v320
    %v884 = vunpack.c.h.b16 %v320
    %v885 = vunpack.c.l.b16 %v321
    %v886 = vunpack.c.h.b16 %v321
    %v887 = vunpack.c.l.b16 %v322
    %v888 = vunpack.c.h.b16 %v322
    %v889 = vunpack.c.l.b16 %v323
    %v890 = vunpack.c.h.b16 %v323
    %v891 = vunpack.c.l.b16 %v324
    %v892 = vunpack.c.h.b16 %v324
    %v893 = vunpack.c.l.b16 %v325
    %v894 = vunpack.c.h.b16 %v325
    %v895 = vunpack.c.l.b16 %v326
    %v896 = vunpack.c.h.b16 %v326
    %v897 = vunpack.c.l.b16 %v327
    %v898 = vunpack.c.h.b16 %v327
    %v899 = vunpack.c.l.b16 %v328
    %v900 = vunpack.c.h.b16 %v328
    %v901 = vunpack.c.l.b16 %v329
    %v902 = vunpack.c.h.b16 %v329
    %v903 = vunpack.c.l.b16 %v330
    %v904 = vunpack.c.h.b16 %v330
    %v905 = vunpack.c.l.b16 %v331
    %v906 = vunpack.c.h.b16 %v331
    %v907 = vunpack.c.l.b16 %v332
    %v908 = vunpack.c.h.b16 %v332
    %v909 = vpack.c.b16 %v529, %v525
    %v910 = vpack.c.b16 %v530, %v526
    %v911 = vpack.c.b16 %v531, %v527
    %v912 = vpack.c.b16 %v532, %v528
    %v913 = vpack.c.b16 %v537, %v533
    %v914 = vpack.c.b16 %v538, %v534
    %v915 = vpack.c.b16 %v539, %v535
    %v916 = vpack.c.b16 %v540, %v536
    %v917 = vpack.c.b16 %v545, %v541
    %v918 = vpack.c.b16 %v546, %v542
    %v919 = vpack.c.b16 %v547, %v543
    %v920 = vpack.c.b16 %v548, %v544
    %v921 = vpack.c.b16 %v553, %v549
    %v922 = vpack.c.b16 %v554, %v550
    %v923 = vpack.c.b16 %v555, %v551
    %v924 = vpack.c.b16 %v556, %v552
    %v925 = vpack.c.b16 %v561, %v557
    %v926 = vpack.c.b16 %v562, %v558
    %v927 = vpack.c.b16 %v563, %v559
    %v928 = vpack.c.b16 %v564, %v560
    %v929 = vpack.c.b16 %v569, %v565
    %v930 = vpack.c.b16 %v570, %v566
    %v931 = vpack.c.b16 %v571, %v567
    %v932 = vpack.c.b16 %v572, %v568
    %v933 = vpack.c.b16 %v577, %v573
    %v934 = vpack.c.b16 %v578, %v574
    %v935 = vpack.c.b16 %v579, %v575
    %v936 = vpack.c.b16 %v580, %v576
    %v937 = vpack.c.b16 %v585, %v581
    %v938 = vpack.c.b16 %v586, %v582
    %v939 = vpack.c.b16 %v587, %v583
    %v940 = vpack.c.b16 %v588, %v584
    %v941 = vpack.c.b16 %v593, %v589
    %v942 = vpack.c.b16 %v594, %v590
    %v943 = vpack.c.b16 %v595, %v591
    %v944 = vpack.c.b16 %v596, %v592
    %v945 = vpack.c.b16 %v601, %v597
    %v946 = vpack.c.b16 %v602, %v598
    %v947 = vpack.c.b16 %v603, %v599
    %v948 = vpack.c.b16 %v604, %v600
    %v949 = vpack.c.b16 %v609, %v605
    %v950 = vpack.c.b16 %v610, %v606
    %v951 = vpack.c.b16 %v611, %v607
    %v952 = vpack.c.b16 %v612, %v608
    %v953 = vpack.c.b16 %v617, %v613
    %v954 = vpack.c.b16 %v618, %v614
    %v955 = vpack.c.b16 %v619, %v615
    %v956 = vpack.c.b16 %v620, %v616
    %v957 = vpack.c.b16 %v625, %v621
    %v958 = vpack.c.b16 %v626, %v622
    %v959 = vpack.c.b16 %v627, %v623
    %v960 = vpack.c.b16 %v628, %v624
    %v961 = vpack.c.b16 %v633, %v629
    %v962 = vpack.c.b16 %v634, %v630
    %v963 = vpack.c.b16 %v635, %v631
    %v964 = vpack.c.b16 %v636, %v632
    %v965 = vpack.c.b16 %v641, %v637
    %v966 = vpack.c.b16 %v642, %v638
    %v967 = vpack.c.b16 %v643, %v639
    %v968 = vpack.c.b16 %v644, %v640
    %v969 = vpack.c.b16 %v649, %v645
    %v970 = vpack.c.b16 %v650, %v646
    %v971 = vpack.c.b16 %v651, %v647
    %v972 = vpack.c.b16 %v652, %v648
    %v973 = vpack.c.b16 %v657, %v653
    %v974 = vpack.c.b16 %v658, %v654
    %v975 = vpack.c.b16 %v659, %v655
    %v976 = vpack.c.b16 %v660, %v656
    %v977 = vpack.c.b16 %v665, %v661
    %v978 = vpack.c.b16 %v666, %v662
    %v979 = vpack.c.b16 %v667, %v663
    %v980 = vpack.c.b16 %v668, %v664
    %v981 = vpack.c.b16 %v673, %v669
    %v982 = vpack.c.b16 %v674, %v670
    %v983 = vpack.c.b16 %v675, %v671
    %v984 = vpack.c.b16 %v676, %v672
    %v985 = vpack.c.b16 %v681, %v677
    %v986 = vpack.c.b16 %v682, %v678
    %v987 = vpack.c.b16 %v683, %v679
    %v988 = vpack.c.b16 %v684, %v680
    %v989 = vpack.c.b16 %v689, %v685
    %v990 = vpack.c.b16 %v690, %v686
    %v991 = vpack.c.b16 %v691, %v687
    %v992 = vpack.c.b16 %v692, %v688
    %v993 = vpack.c.b16 %v697, %v693
    %v994 = vpack.c.b16 %v698, %v694
    %v995 = vpack.c.b16 %v699, %v695
    %v996 = vpack.c.b16 %v700, %v696
    %v997 = vpack.c.b16 %v705, %v701
    %v998 = vpack.c.b16 %v706, %v702
    %v999 = vpack.c.b16 %v707, %v703
    %v1000 = vpack.c.b16 %v708, %v704
    %v1001 = vpack.c.b16 %v713, %v709
    %v1002 = vpack.c.b16 %v714, %v710
    %v1003 = vpack.c.b16 %v715, %v711
    %v1004 = vpack.c.b16 %v716, %v712
    %v1005 = vpack.c.b16 %v721, %v717
    %v1006 = vpack.c.b16 %v722, %v718
    %v1007 = vpack.c.b16 %v723, %v719
    %v1008 = vpack.c.b16 %v724, %v720
    %v1009 = vpack.c.b16 %v729, %v725
    %v1010 = vpack.c.b16 %v730, %v726
    %v1011 = vpack.c.b16 %v731, %v727
    %v1012 = vpack.c.b16 %v732, %v728
    %v1013 = vpack.c.b16 %v737, %v733
    %v1014 = vpack.c.b16 %v738, %v734
    %v1015 = vpack.c.b16 %v739, %v735
    %v1016 = vpack.c.b16 %v740, %v736
    %v1017 = vpack.c.b16 %v745, %v741
    %v1018 = vpack.c.b16 %v746, %v742
    %v1019 = vpack.c.b16 %v747, %v743
    %v1020 = vpack.c.b16 %v748, %v744
    %v1021 = vpack.c.b16 %v753, %v749
    %v1022 = vpack.c.b16 %v754, %v750
    %v1023 = vpack.c.b16 %v755, %v751
    %v1024 = vpack.c.b16 %v756, %v752
    %v1025 = vpack.c.b16 %v761, %v757
    %v1026 = vpack.c.b16 %v762, %v758
    %v1027 = vpack.c.b16 %v763, %v759
    %v1028 = vpack.c.b16 %v764, %v760
    %v1029 = vpack.c.b16 %v769, %v765
    %v1030 = vpack.c.b16 %v770, %v766
    %v1031 = vpack.c.b16 %v771, %v767
    %v1032 = vpack.c.b16 %v772, %v768
    %v1033 = vpack.c.b16 %v777, %v773
    %v1034 = vpack.c.b16 %v778, %v774
    %v1035 = vpack.c.b16 %v779, %v775
    %v1036 = vpack.c.b16 %v780, %v776
    %v1037 = vpack.c.b16 %v785, %v781
    %v1038 = vpack.c.b16 %v786, %v782
    %v1039 = vpack.c.b16 %v787, %v783
    %v1040 = vpack.c.b16 %v788, %v784
    %v1041 = vpack.c.b16 %v793, %v789
    %v1042 = vpack.c.b16 %v794, %v790
    %v1043 = vpack.c.b16 %v795, %v791
    %v1044 = vpack.c.b16 %v796, %v792
    %v1045 = vpack.c.b16 %v801, %v797
    %v1046 = vpack.c.b16 %v802, %v798
    %v1047 = vpack.c.b16 %v803, %v799
    %v1048 = vpack.c.b16 %v804, %v800
    %v1049 = vpack.c.b16 %v809, %v805
    %v1050 = vpack.c.b16 %v810, %v806
    %v1051 = vpack.c.b16 %v811, %v807
    %v1052 = vpack.c.b16 %v812, %v808
    %v1053 = vpack.c.b16 %v817, %v813
    %v1054 = vpack.c.b16 %v818, %v814
    %v1055 = vpack.c.b16 %v819, %v815
    %v1056 = vpack.c.b16 %v820, %v816
    %v1057 = vpack.c.b16 %v825, %v821
    %v1058 = vpack.c.b16 %v826, %v822
    %v1059 = vpack.c.b16 %v827, %v823
    %v1060 = vpack.c.b16 %v828, %v824
    %v1061 = vpack.c.b16 %v833, %v829
    %v1062 = vpack.c.b16 %v834, %v830
    %v1063 = vpack.c.b16 %v835, %v831
    %v1064 = vpack.c.b16 %v836, %v832
    %v1065 = vpack.c.b16 %v841, %v837
    %v1066 = vpack.c.b16 %v842, %v838
    %v1067 = vpack.c.b16 %v843, %v839
    %v1068 = vpack.c.b16 %v844, %v840
    %v1069 = vpack.c.b16 %v849, %v845
    %v1070 = vpack.c.b16 %v850, %v846
    %v1071 = vpack.c.b16 %v851, %v847
    %v1072 = vpack.c.b16 %v852, %v848
    %v1073 = vpack.c.b16 %v857, %v853
    %v1074 = vpack.c.b16 %v858, %v854
    %v1075 = vpack.c.b16 %v859, %v855
    %v1076 = vpack.c.b16 %v860, %v856
    %v1077 = vpack.c.b16 %v865, %v861
    %v1078 = vpack.c.b16 %v866, %v862
    %v1079 = vpack.c.b16 %v867, %v863
    %v1080 = vpack.c.b16 %v868, %v864
    %v1081 = vpack.c.b16 %v873, %v869
    %v1082 = vpack.c.b16 %v874, %v870
    %v1083 = vpack.c.b16 %v875, %v871
    %v1084 = vpack.c.b16 %v876, %v872
    %v1085 = vpack.c.b16 %v881, %v877
    %v1086 = vpack.c.b16 %v882, %v878
    %v1087 = vpack.c.b16 %v883, %v879
    %v1088 = vpack.c.b16 %v884, %v880
    %v1089 = vpack.c.b16 %v889, %v885
    %v1090 = vpack.c.b16 %v890, %v886
    %v1091 = vpack.c.b16 %v891, %v887
    %v1092 = vpack.c.b16 %v892, %v888
    %v1093 = vpack.c.b16 %v897, %v893
    %v1094 = vpack.c.b16 %v898, %v894
    %v1095 = vpack.c.b16 %v899, %v895
    %v1096 = vpack.c.b16 %v900, %v896
    %v1097 = vpack.c.b16 %v905, %v901
    %v1098 = vpack.c.b16 %v906, %v902
    %v1099 = vpack.c.b16 %v907, %v903
    %v1100 = vpack.c.b16 %v908, %v904
    %1293 = vmatpush.bf16.msra.mxu0 %v937
    %1294 = vmatpush.bf16.msra.mxu0 %v933
    %1295 = vmatpush.bf16.msra.mxu0 %v929
    %1296 = vmatpush.bf16.msra.mxu0 %v925
    %1297 = vmatpush.bf16.msra.mxu0 %v921
    %1298 = vmatpush.bf16.msra.mxu0 %v917
    %1299 = vmatpush.bf16.msra.mxu0 %v913
    %1300 = vmatpush.bf16.msra.mxu0 %v909
    %1301 = vmatmul.bf16.gmra.mxu0 %v135
    %v1302 = vpop.f32.mrf.mxu0
    %v1303 = vadd.f32 0.0, %v1302
    %v1304 = vpop.f32.mrf.mxu0
    %v1305 = vadd.f32 0.0, %v1304
    %1306 = vdwg.mxu0
    %1307 = vmatpush.bf16.msra.mxu0 %v969
    %1308 = vmatpush.bf16.msra.mxu0 %v965
    %1309 = vmatpush.bf16.msra.mxu0 %v961
    %1310 = vmatpush.bf16.msra.mxu0 %v957
    %1311 = vmatpush.bf16.msra.mxu0 %v953
    %1312 = vmatpush.bf16.msra.mxu0 %v949
    %1313 = vmatpush.bf16.msra.mxu0 %v945
    %1314 = vmatpush.bf16.msra.mxu0 %v941
    %1315 = vmatmul.bf16.gmra.mxu0 %v136
    %v1316 = vpop.f32.mrf.mxu0
    %v1317 = vadd.f32 %v1303, %v1316
    %v1318 = vpop.f32.mrf.mxu0
    %v1319 = vadd.f32 %v1305, %v1318
    %1320 = vdwg.mxu0
    %1321 = vmatpush.bf16.msra.mxu0 %v1001
    %1322 = vmatpush.bf16.msra.mxu0 %v997
    %1323 = vmatpush.bf16.msra.mxu0 %v993
    %1324 = vmatpush.bf16.msra.mxu0 %v989
    %1325 = vmatpush.bf16.msra.mxu0 %v985
    %1326 = vmatpush.bf16.msra.mxu0 %v981
    %1327 = vmatpush.bf16.msra.mxu0 %v977
    %1328 = vmatpush.bf16.msra.mxu0 %v973
    %1329 = vmatmul.bf16.gmra.mxu0 %v137
    %v1330 = vpop.f32.mrf.mxu0
    %v1331 = vadd.f32 %v1317, %v1330
    %v1332 = vpop.f32.mrf.mxu0
    %v1333 = vadd.f32 %v1319, %v1332
    %1334 = vdwg.mxu0
    %1335 = vmatpush.bf16.msra.mxu0 %v1033
    %1336 = vmatpush.bf16.msra.mxu0 %v1029
    %1337 = vmatpush.bf16.msra.mxu0 %v1025
    %1338 = vmatpush.bf16.msra.mxu0 %v1021
    %1339 = vmatpush.bf16.msra.mxu0 %v1017
    %1340 = vmatpush.bf16.msra.mxu0 %v1013
    %1341 = vmatpush.bf16.msra.mxu0 %v1009
    %1342 = vmatpush.bf16.msra.mxu0 %v1005
    %1343 = vmatmul.bf16.gmra.mxu0 %v138
    %v1344 = vpop.f32.mrf.mxu0
    %v1345 = vadd.f32 %v1331, %v1344
    %v1346 = vpop.f32.mrf.mxu0
    %v1347 = vadd.f32 %v1333, %v1346
    %1348 = vdwg.mxu0
    %1349 = vmatpush.bf16.msra.mxu0 %v1065
    %1350 = vmatpush.bf16.msra.mxu0 %v1061
    %1351 = vmatpush.bf16.msra.mxu0 %v1057
    %1352 = vmatpush.bf16.msra.mxu0 %v1053
    %1353 = vmatpush.bf16.msra.mxu0 %v1049
    %1354 = vmatpush.bf16.msra.mxu0 %v1045
    %1355 = vmatpush.bf16.msra.mxu0 %v1041
    %1356 = vmatpush.bf16.msra.mxu0 %v1037
    %1357 = vmatmul.bf16.gmra.mxu0 %v139
    %v1358 = vpop.f32.mrf.mxu0
    %v1359 = vadd.f32 %v1345, %v1358
    %v1360 = vpop.f32.mrf.mxu0
    %v1361 = vadd.f32 %v1347, %v1360
    %1362 = vdwg.mxu0
    %1363 = vmatpush.bf16.msra.mxu0 %v1097
    %1364 = vmatpush.bf16.msra.mxu0 %v1093
    %1365 = vmatpush.bf16.msra.mxu0 %v1089
    %1366 = vmatpush.bf16.msra.mxu0 %v1085
    %1367 = vmatpush.bf16.msra.mxu0 %v1081
    %1368 = vmatpush.bf16.msra.mxu0 %v1077
    %1369 = vmatpush.bf16.msra.mxu0 %v1073
    %1370 = vmatpush.bf16.msra.mxu0 %v1069
    %1371 = vmatmul.bf16.gmra.mxu0 %v140
    %v1372 = vpop.f32.mrf.mxu0
    %v1373 = vadd.f32 %v1359, %v1372
    %v1374 = vpop.f32.mrf.mxu0
    %v1375 = vadd.f32 %v1361, %v1374
    %1376 = vdwg.mxu0
    %1377 = vmatpush.bf16.msra.mxu0 %v938
    %1378 = vmatpush.bf16.msra.mxu0 %v934
    %1379 = vmatpush.bf16.msra.mxu0 %v930
    %1380 = vmatpush.bf16.msra.mxu0 %v926
    %1381 = vmatpush.bf16.msra.mxu0 %v922
    %1382 = vmatpush.bf16.msra.mxu0 %v918
    %1383 = vmatpush.bf16.msra.mxu0 %v914
    %1384 = vmatpush.bf16.msra.mxu0 %v910
    %1385 = vmatmul.bf16.gmra.mxu0 %v135
    %v1386 = vpop.f32.mrf.mxu0
    %v1387 = vadd.f32 0.0, %v1386
    %v1388 = vpop.f32.mrf.mxu0
    %v1389 = vadd.f32 0.0, %v1388
    %1390 = vdwg.mxu0
    %1391 = vmatpush.bf16.msra.mxu0 %v970
    %1392 = vmatpush.bf16.msra.mxu0 %v966
    %1393 = vmatpush.bf16.msra.mxu0 %v962
    %1394 = vmatpush.bf16.msra.mxu0 %v958
    %1395 = vmatpush.bf16.msra.mxu0 %v954
    %1396 = vmatpush.bf16.msra.mxu0 %v950
    %1397 = vmatpush.bf16.msra.mxu0 %v946
    %1398 = vmatpush.bf16.msra.mxu0 %v942
    %1399 = vmatmul.bf16.gmra.mxu0 %v136
    %v1400 = vpop.f32.mrf.mxu0
    %v1401 = vadd.f32 %v1387, %v1400
    %v1402 = vpop.f32.mrf.mxu0
    %v1403 = vadd.f32 %v1389, %v1402
    %1404 = vdwg.mxu0
    %1405 = vmatpush.bf16.msra.mxu0 %v1002
    %1406 = vmatpush.bf16.msra.mxu0 %v998
    %1407 = vmatpush.bf16.msra.mxu0 %v994
    %1408 = vmatpush.bf16.msra.mxu0 %v990
    %1409 = vmatpush.bf16.msra.mxu0 %v986
    %1410 = vmatpush.bf16.msra.mxu0 %v982
    %1411 = vmatpush.bf16.msra.mxu0 %v978
    %1412 = vmatpush.bf16.msra.mxu0 %v974
    %1413 = vmatmul.bf16.gmra.mxu0 %v137
    %v1414 = vpop.f32.mrf.mxu0
    %v1415 = vadd.f32 %v1401, %v1414
    %v1416 = vpop.f32.mrf.mxu0
    %v1417 = vadd.f32 %v1403, %v1416
    %1418 = vdwg.mxu0
    %1419 = vmatpush.bf16.msra.mxu0 %v1034
    %1420 = vmatpush.bf16.msra.mxu0 %v1030
    %1421 = vmatpush.bf16.msra.mxu0 %v1026
    %1422 = vmatpush.bf16.msra.mxu0 %v1022
    %1423 = vmatpush.bf16.msra.mxu0 %v1018
    %1424 = vmatpush.bf16.msra.mxu0 %v1014
    %1425 = vmatpush.bf16.msra.mxu0 %v1010
    %1426 = vmatpush.bf16.msra.mxu0 %v1006
    %1427 = vmatmul.bf16.gmra.mxu0 %v138
    %v1428 = vpop.f32.mrf.mxu0
    %v1429 = vadd.f32 %v1415, %v1428
    %v1430 = vpop.f32.mrf.mxu0
    %v1431 = vadd.f32 %v1417, %v1430
    %1432 = vdwg.mxu0
    %1433 = vmatpush.bf16.msra.mxu0 %v1066
    %1434 = vmatpush.bf16.msra.mxu0 %v1062
    %1435 = vmatpush.bf16.msra.mxu0 %v1058
    %1436 = vmatpush.bf16.msra.mxu0 %v1054
    %1437 = vmatpush.bf16.msra.mxu0 %v1050
    %1438 = vmatpush.bf16.msra.mxu0 %v1046
    %1439 = vmatpush.bf16.msra.mxu0 %v1042
    %1440 = vmatpush.bf16.msra.mxu0 %v1038
    %1441 = vmatmul.bf16.gmra.mxu0 %v139
    %v1442 = vpop.f32.mrf.mxu0
    %v1443 = vadd.f32 %v1429, %v1442
    %v1444 = vpop.f32.mrf.mxu0
    %v1445 = vadd.f32 %v1431, %v1444
    %1446 = vdwg.mxu0
    %1447 = vmatpush.bf16.msra.mxu0 %v1098
    %1448 = vmatpush.bf16.msra.mxu0 %v1094
    %1449 = vmatpush.bf16.msra.mxu0 %v1090
    %1450 = vmatpush.bf16.msra.mxu0 %v1086
    %1451 = vmatpush.bf16.msra.mxu0 %v1082
    %1452 = vmatpush.bf16.msra.mxu0 %v1078
    %1453 = vmatpush.bf16.msra.mxu0 %v1074
    %1454 = vmatpush.bf16.msra.mxu0 %v1070
    %1455 = vmatmul.bf16.gmra.mxu0 %v140
    %v1456 = vpop.f32.mrf.mxu0
    %v1457 = vadd.f32 %v1443, %v1456
    %v1458 = vpop.f32.mrf.mxu0
    %v1459 = vadd.f32 %v1445, %v1458
    %1460 = vdwg.mxu0
    %1461 = vmatpush.bf16.msra.mxu0 %v939
    %1462 = vmatpush.bf16.msra.mxu0 %v935
    %1463 = vmatpush.bf16.msra.mxu0 %v931
    %1464 = vmatpush.bf16.msra.mxu0 %v927
    %1465 = vmatpush.bf16.msra.mxu0 %v923
    %1466 = vmatpush.bf16.msra.mxu0 %v919
    %1467 = vmatpush.bf16.msra.mxu0 %v915
    %1468 = vmatpush.bf16.msra.mxu0 %v911
    %1469 = vmatmul.bf16.gmra.mxu0 %v135
    %v1470 = vpop.f32.mrf.mxu0
    %v1471 = vadd.f32 0.0, %v1470
    %v1472 = vpop.f32.mrf.mxu0
    %v1473 = vadd.f32 0.0, %v1472
    %1474 = vdwg.mxu0
    %1475 = vmatpush.bf16.msra.mxu0 %v971
    %1476 = vmatpush.bf16.msra.mxu0 %v967
    %1477 = vmatpush.bf16.msra.mxu0 %v963
    %1478 = vmatpush.bf16.msra.mxu0 %v959
    %1479 = vmatpush.bf16.msra.mxu0 %v955
    %1480 = vmatpush.bf16.msra.mxu0 %v951
    %1481 = vmatpush.bf16.msra.mxu0 %v947
    %1482 = vmatpush.bf16.msra.mxu0 %v943
    %1483 = vmatmul.bf16.gmra.mxu0 %v136
    %v1484 = vpop.f32.mrf.mxu0
    %v1485 = vadd.f32 %v1471, %v1484
    %v1486 = vpop.f32.mrf.mxu0
    %v1487 = vadd.f32 %v1473, %v1486
    %1488 = vdwg.mxu0
    %1489 = vmatpush.bf16.msra.mxu0 %v1003
    %1490 = vmatpush.bf16.msra.mxu0 %v999
    %1491 = vmatpush.bf16.msra.mxu0 %v995
    %1492 = vmatpush.bf16.msra.mxu0 %v991
    %1493 = vmatpush.bf16.msra.mxu0 %v987
    %1494 = vmatpush.bf16.msra.mxu0 %v983
    %1495 = vmatpush.bf16.msra.mxu0 %v979
    %1496 = vmatpush.bf16.msra.mxu0 %v975
    %1497 = vmatmul.bf16.gmra.mxu0 %v137
    %v1498 = vpop.f32.mrf.mxu0
    %v1499 = vadd.f32 %v1485, %v1498
    %v1500 = vpop.f32.mrf.mxu0
    %v1501 = vadd.f32 %v1487, %v1500
    %1502 = vdwg.mxu0
    %1503 = vmatpush.bf16.msra.mxu0 %v1035
    %1504 = vmatpush.bf16.msra.mxu0 %v1031
    %1505 = vmatpush.bf16.msra.mxu0 %v1027
    %1506 = vmatpush.bf16.msra.mxu0 %v1023
    %1507 = vmatpush.bf16.msra.mxu0 %v1019
    %1508 = vmatpush.bf16.msra.mxu0 %v1015
    %1509 = vmatpush.bf16.msra.mxu0 %v1011
    %1510 = vmatpush.bf16.msra.mxu0 %v1007
    %1511 = vmatmul.bf16.gmra.mxu0 %v138
    %v1512 = vpop.f32.mrf.mxu0
    %v1513 = vadd.f32 %v1499, %v1512
    %v1514 = vpop.f32.mrf.mxu0
    %v1515 = vadd.f32 %v1501, %v1514
    %1516 = vdwg.mxu0
    %1517 = vmatpush.bf16.msra.mxu0 %v1067
    %1518 = vmatpush.bf16.msra.mxu0 %v1063
    %1519 = vmatpush.bf16.msra.mxu0 %v1059
    %1520 = vmatpush.bf16.msra.mxu0 %v1055
    %1521 = vmatpush.bf16.msra.mxu0 %v1051
    %1522 = vmatpush.bf16.msra.mxu0 %v1047
    %1523 = vmatpush.bf16.msra.mxu0 %v1043
    %1524 = vmatpush.bf16.msra.mxu0 %v1039
    %1525 = vmatmul.bf16.gmra.mxu0 %v139
    %v1526 = vpop.f32.mrf.mxu0
    %v1527 = vadd.f32 %v1513, %v1526
    %v1528 = vpop.f32.mrf.mxu0
    %v1529 = vadd.f32 %v1515, %v1528
    %1530 = vdwg.mxu0
    %1531 = vmatpush.bf16.msra.mxu0 %v1099
    %1532 = vmatpush.bf16.msra.mxu0 %v1095
    %1533 = vmatpush.bf16.msra.mxu0 %v1091
    %1534 = vmatpush.bf16.msra.mxu0 %v1087
    %1535 = vmatpush.bf16.msra.mxu0 %v1083
    %1536 = vmatpush.bf16.msra.mxu0 %v1079
    %1537 = vmatpush.bf16.msra.mxu0 %v1075
    %1538 = vmatpush.bf16.msra.mxu0 %v1071
    %1539 = vmatmul.bf16.gmra.mxu0 %v140
    %v1540 = vpop.f32.mrf.mxu0
    %v1541 = vadd.f32 %v1527, %v1540
    %v1542 = vpop.f32.mrf.mxu0
    %v1543 = vadd.f32 %v1529, %v1542
    %1544 = vdwg.mxu0
    %1545 = vmatpush.bf16.msra.mxu0 %v940
    %1546 = vmatpush.bf16.msra.mxu0 %v936
    %1547 = vmatpush.bf16.msra.mxu0 %v932
    %1548 = vmatpush.bf16.msra.mxu0 %v928
    %1549 = vmatpush.bf16.msra.mxu0 %v924
    %1550 = vmatpush.bf16.msra.mxu0 %v920
    %1551 = vmatpush.bf16.msra.mxu0 %v916
    %1552 = vmatpush.bf16.msra.mxu0 %v912
    %1553 = vmatmul.bf16.gmra.mxu0 %v135
    %v1554 = vpop.f32.mrf.mxu0
    %v1555 = vadd.f32 0.0, %v1554
    %v1556 = vpop.f32.mrf.mxu0
    %v1557 = vadd.f32 0.0, %v1556
    %1558 = vdwg.mxu0
    %1559 = vmatpush.bf16.msra.mxu0 %v972
    %1560 = vmatpush.bf16.msra.mxu0 %v968
    %1561 = vmatpush.bf16.msra.mxu0 %v964
    %1562 = vmatpush.bf16.msra.mxu0 %v960
    %1563 = vmatpush.bf16.msra.mxu0 %v956
    %1564 = vmatpush.bf16.msra.mxu0 %v952
    %1565 = vmatpush.bf16.msra.mxu0 %v948
    %1566 = vmatpush.bf16.msra.mxu0 %v944
    %1567 = vmatmul.bf16.gmra.mxu0 %v136
    %v1568 = vpop.f32.mrf.mxu0
    %v1569 = vadd.f32 %v1555, %v1568
    %v1570 = vpop.f32.mrf.mxu0
    %v1571 = vadd.f32 %v1557, %v1570
    %1572 = vdwg.mxu0
    %1573 = vmatpush.bf16.msra.mxu0 %v1004
    %1574 = vmatpush.bf16.msra.mxu0 %v1000
    %1575 = vmatpush.bf16.msra.mxu0 %v996
    %1576 = vmatpush.bf16.msra.mxu0 %v992
    %1577 = vmatpush.bf16.msra.mxu0 %v988
    %1578 = vmatpush.bf16.msra.mxu0 %v984
    %1579 = vmatpush.bf16.msra.mxu0 %v980
    %1580 = vmatpush.bf16.msra.mxu0 %v976
    %1581 = vmatmul.bf16.gmra.mxu0 %v137
    %v1582 = vpop.f32.mrf.mxu0
    %v1583 = vadd.f32 %v1569, %v1582
    %v1584 = vpop.f32.mrf.mxu0
    %v1585 = vadd.f32 %v1571, %v1584
    %1586 = vdwg.mxu0
    %1587 = vmatpush.bf16.msra.mxu0 %v1036
    %1588 = vmatpush.bf16.msra.mxu0 %v1032
    %1589 = vmatpush.bf16.msra.mxu0 %v1028
    %1590 = vmatpush.bf16.msra.mxu0 %v1024
    %1591 = vmatpush.bf16.msra.mxu0 %v1020
    %1592 = vmatpush.bf16.msra.mxu0 %v1016
    %1593 = vmatpush.bf16.msra.mxu0 %v1012
    %1594 = vmatpush.bf16.msra.mxu0 %v1008
    %1595 = vmatmul.bf16.gmra.mxu0 %v138
    %v1596 = vpop.f32.mrf.mxu0
    %v1597 = vadd.f32 %v1583, %v1596
    %v1598 = vpop.f32.mrf.mxu0
    %v1599 = vadd.f32 %v1585, %v1598
    %1600 = vdwg.mxu0
    %1601 = vmatpush.bf16.msra.mxu0 %v1068
    %1602 = vmatpush.bf16.msra.mxu0 %v1064
    %1603 = vmatpush.bf16.msra.mxu0 %v1060
    %1604 = vmatpush.bf16.msra.mxu0 %v1056
    %1605 = vmatpush.bf16.msra.mxu0 %v1052
    %1606 = vmatpush.bf16.msra.mxu0 %v1048
    %1607 = vmatpush.bf16.msra.mxu0 %v1044
    %1608 = vmatpush.bf16.msra.mxu0 %v1040
    %1609 = vmatmul.bf16.gmra.mxu0 %v139
    %v1610 = vpop.f32.mrf.mxu0
    %v1611 = vadd.f32 %v1597, %v1610
    %v1612 = vpop.f32.mrf.mxu0
    %v1613 = vadd.f32 %v1599, %v1612
    %1614 = vdwg.mxu0
    %1615 = vmatpush.bf16.msra.mxu0 %v1100
    %1616 = vmatpush.bf16.msra.mxu0 %v1096
    %1617 = vmatpush.bf16.msra.mxu0 %v1092
    %1618 = vmatpush.bf16.msra.mxu0 %v1088
    %1619 = vmatpush.bf16.msra.mxu0 %v1084
    %1620 = vmatpush.bf16.msra.mxu0 %v1080
    %1621 = vmatpush.bf16.msra.mxu0 %v1076
    %1622 = vmatpush.bf16.msra.mxu0 %v1072
    %1623 = vmatmul.bf16.gmra.mxu0 %v140
    %v1624 = vpop.f32.mrf.mxu0
    %v1625 = vadd.f32 %v1611, %v1624
    %v1626 = vpop.f32.mrf.mxu0
    %v1627 = vadd.f32 %v1613, %v1626
    %1628 = vdwg.mxu0
    %v1629 = vld [vmem:[#allocation4] sm:$0xf]
    %v1630 = vadd.f32 %v1373, %v1375
    %v1631 = vrot.slane %v1630, 4
    %v1632 = vadd.f32 %v1630, %v1631
    %v1633 = vrot.slane %v1632, 2
    %v1634 = vadd.f32 %v1632, %v1633
    %v1635 = vrot.slane %v1634, 1
    %v1636 = vadd.f32 %v1634, %v1635
    %v1637 = vadd.f32 %v1457, %v1459
    %v1638 = vrot.slane %v1637, 4
    %v1639 = vadd.f32 %v1637, %v1638
    %v1640 = vrot.slane %v1639, 2
    %v1641 = vadd.f32 %v1639, %v1640
    %v1642 = vrot.slane %v1641, 1
    %v1643 = vadd.f32 %v1641, %v1642
    %v1644 = vadd.f32 %v1541, %v1543
    %v1645 = vrot.slane %v1644, 4
    %v1646 = vadd.f32 %v1644, %v1645
    %v1647 = vrot.slane %v1646, 2
    %v1648 = vadd.f32 %v1646, %v1647
    %v1649 = vrot.slane %v1648, 1
    %v1650 = vadd.f32 %v1648, %v1649
    %v1651 = vadd.f32 %v1625, %v1627
    %v1652 = vrot.slane %v1651, 4
    %v1653 = vadd.f32 %v1651, %v1652
    %v1654 = vrot.slane %v1653, 2
    %v1655 = vadd.f32 %v1653, %v1654
    %v1656 = vrot.slane %v1655, 1
    %v1657 = vadd.f32 %v1655, %v1656
    %v1662 = vrot.slane %v1643, 7
    %v1663 = vrot.slane %v1650, 6
    %v1664 = vrot.slane %v1657, 5
    %vm1665 = vcmask 1040384
    %v1666 = vsel %vm1665, %v1636, %v1662
    %vm1667 = vcmask 1042434
    %v1668 = vsel %vm1667, %v1663, %v1664
    %vm1669 = vcmask 1041408
    %v1670 = vsel %vm1669, %v1666, %v1668
    %v1672 = vadd.f32 %v1629, %v1670
    %v1673 = vlaneseq
    %vm1674 = vcmp.ge.s32.totalorder %v1673, 0
    %vm1675 = vcmp.lt.s32.totalorder %v1673, 512
    %vm1676 = vmand %vm1674, %vm1675
    %1677 = vst.msk [vmem:[#allocation4] sm:$0xf] %vm1676, %v1672
    %v1678 = vld [vmem:[#allocation5] sm:$0xf]
    %v1679 = vmul.f32 %v1373, %v1373
    %v1680 = vmul.f32 %v1457, %v1457
    %v1681 = vmul.f32 %v1541, %v1541
    %v1682 = vmul.f32 %v1625, %v1625
    %v1683 = vmul.f32 %v1375, %v1375
    %v1684 = vmul.f32 %v1459, %v1459
    %v1685 = vmul.f32 %v1543, %v1543
    %v1686 = vmul.f32 %v1627, %v1627
    %v1687 = vadd.f32 %v1679, %v1683
    %v1688 = vrot.slane %v1687, 4
    %v1689 = vadd.f32 %v1687, %v1688
    %v1690 = vrot.slane %v1689, 2
    %v1691 = vadd.f32 %v1689, %v1690
    %v1692 = vrot.slane %v1691, 1
    %v1693 = vadd.f32 %v1691, %v1692
    %v1694 = vadd.f32 %v1680, %v1684
    %v1695 = vrot.slane %v1694, 4
    %v1696 = vadd.f32 %v1694, %v1695
    %v1697 = vrot.slane %v1696, 2
    %v1698 = vadd.f32 %v1696, %v1697
    %v1699 = vrot.slane %v1698, 1
    %v1700 = vadd.f32 %v1698, %v1699
    %v1701 = vadd.f32 %v1681, %v1685
    %v1702 = vrot.slane %v1701, 4
    %v1703 = vadd.f32 %v1701, %v1702
    %v1704 = vrot.slane %v1703, 2
    %v1705 = vadd.f32 %v1703, %v1704
    %v1706 = vrot.slane %v1705, 1
    %v1707 = vadd.f32 %v1705, %v1706
    %v1708 = vadd.f32 %v1682, %v1686
    %v1709 = vrot.slane %v1708, 4
    %v1710 = vadd.f32 %v1708, %v1709
    %v1711 = vrot.slane %v1710, 2
    %v1712 = vadd.f32 %v1710, %v1711
    %v1713 = vrot.slane %v1712, 1
    %v1714 = vadd.f32 %v1712, %v1713
    %v1719 = vrot.slane %v1700, 7
    %v1720 = vrot.slane %v1707, 6
    %v1721 = vrot.slane %v1714, 5
    %v1722 = vsel %vm1665, %v1693, %v1719
    %v1723 = vsel %vm1667, %v1720, %v1721
    %v1724 = vsel %vm1669, %v1722, %v1723
    %v1726 = vadd.f32 %v1678, %v1724
    %1727 = vst.msk [vmem:[#allocation5] sm:$0xf] %vm1676, %v1726
    %v1728 = vpack.c.bf16 %v1457, %v1373
    %v1729 = vpack.c.bf16 %v1625, %v1541
    %v1730 = vpack.c.bf16 %v1459, %v1375
    %v1731 = vpack.c.bf16 %v1627, %v1543
    %s1732 = smul.u32 0, 8
    %s1733 = smul.addr %s1732, 4
    %s1734 = scalar_lea.vmem [#allocation2], %s1733
    %1735 = vst [vmem:[%s1734] sm:$0xff] %v1728
    %1736 = vst [vmem:[%s1734 + $0x8] sm:$0xff] %v1729
    %1737 = vst [vmem:[%s1734 + $0x10] sm:$0xff] %v1730
    %1738 = vst [vmem:[%s1734 + $0x18] sm:$0xff] %v1731
    // Predicated region
    $region66: #{discriminator_forward.1} parent=1 // pred_check
      %p1739 = pneg %p113
    $region67: #{discriminator_forward.1} parent=1 // pred_check_branch
      %1741 = sbr.rel (%p1739) target = $region69
    $region68: #{discriminator_forward.1} parent=1 // pred_region
      %v1742 = vld [vmem:[#allocation4] sm:$0xf]
      %v1743 = vld [vmem:[#allocation5] sm:$0xf]
      %v1744 = vld [vmem:[%s2] sm:$0xf]
      %v1745 = vld [vmem:[#allocation14] sm:$0xf]
      %v1746 = vmul.f32 %v1742, 0.0625
      %v1747 = vmul.f32 %v1743, 0.0625
      %v1748 = vmul.f32 %v1746, %v1746
      %v1749 = vsub.f32 %v1747, %v1748
      %v1750 = vmax.f32 %v1749, 0.0
      %v1751 = vadd.f32 %v1750, 1e-05
      %v1752 = vrsqrt.pop %v1751
      %v1753 = vmul.f32 %v1752, %v1751
      %v1754 = vmul.f32 %v1753, %v1752
      %v1755 = vmul.f32 0.5, %v1754
      %v1756 = vsub.f32 1.5, %v1755
      %v1757 = vmul.f32 %v1752, %v1756
      %vm1758 = vweird.f32 %v1751
      %vm1759 = vweird.f32 %v1752
      %vm1760 = vmor %vm1758, %vm1759
      %v1761 = vsel %vm1760, %v1752, %v1757
      %v1762 = vmul.f32 %v1744, %v1761
      %v1763 = vmul.f32 %v1746, %v1762
      %v1764 = vsub.f32 %v1745, %v1763
      %v1766 = vperm.slane %v1762, 0
      %v1767 = vperm.slane %v1762, 1
      %v1768 = vperm.slane %v1762, 2
      %v1769 = vperm.slane %v1762, 3
      %v1774 = vpack.c.bf16 %v1767, %v1766
      %v1775 = vpack.c.bf16 %v1769, %v1768
      %v1777 = vperm.slane %v1764, 0
      %v1778 = vperm.slane %v1764, 1
      %v1779 = vperm.slane %v1764, 2
      %v1780 = vperm.slane %v1764, 3
      %v1785 = vpack.c.bf16 %v1778, %v1777
      %v1786 = vpack.c.bf16 %v1780, %v1779
      %vm1787 = vcmp.lt.s32.totalorder %v1673, 256
      %vm1788 = vmand %vm1674, %vm1787
      %1789 = vst.msk [vmem:[#allocation6] sm:$0x3] %vm1788, 0.0
      %1790 = vst.msk [vmem:[#allocation7] sm:$0x3] %vm1788, 0.0
      %v1791 = vld [vmem:[#allocation2] sm:$0xff]
      %v1792 = vld [vmem:[#allocation2 + $0x8] sm:$0xff]
      %v1793 = vld [vmem:[#allocation2 + $0x10] sm:$0xff]
      %v1794 = vld [vmem:[#allocation2 + $0x18] sm:$0xff]
      %v1797 = vunpack.c.l.b16 %v1774
      %v1798 = vunpack.c.h.b16 %v1774
      %v1799 = vunpack.c.l.b16 %v1775
      %v1800 = vunpack.c.h.b16 %v1775
      %v1801 = vpack.c.b16 %v1797, %v1797
      %v1802 = vpack.c.b16 %v1798, %v1798
      %v1803 = vpack.c.b16 %v1799, %v1799
      %v1804 = vpack.c.b16 %v1800, %v1800
      %v1806 = vpack.i.b16 %v1801, %v1801
      %v1808 = vperm.slane %v1806, 0
      %v1810 = vpack.i.b16 %v1802, %v1802
      %v1812 = vperm.slane %v1810, 0
      %v1814 = vpack.i.b16 %v1803, %v1803
      %v1816 = vperm.slane %v1814, 0
      %v1818 = vpack.i.b16 %v1804, %v1804
      %v1820 = vperm.slane %v1818, 0
      %v1821 = vunpack.c.l.bf16 %v1791
      %v1822 = vunpack.c.h.bf16 %v1791
      %v1823 = vunpack.c.l.bf16 %v1792
      %v1824 = vunpack.c.h.bf16 %v1792
      %v1825 = vunpack.c.l.bf16 %v1793
      %v1826 = vunpack.c.h.bf16 %v1793
      %v1827 = vunpack.c.l.bf16 %v1794
      %v1828 = vunpack.c.h.bf16 %v1794
      %v1829 = vunpack.c.l.bf16 %v1808
      %v1830 = vunpack.c.l.bf16 %v1812
      %v1831 = vunpack.c.l.bf16 %v1816
      %v1832 = vunpack.c.l.bf16 %v1820
      %v1833 = vmul.f32 %v1821, %v1829
      %v1834 = vmul.f32 %v1822, %v1830
      %v1835 = vmul.f32 %v1823, %v1831
      %v1836 = vmul.f32 %v1824, %v1832
      %v1837 = vmul.f32 %v1825, %v1829
      %v1838 = vmul.f32 %v1826, %v1830
      %v1839 = vmul.f32 %v1827, %v1831
      %v1840 = vmul.f32 %v1828, %v1832
      %v1841 = vpack.c.bf16 %v1834, %v1833
      %v1842 = vpack.c.bf16 %v1836, %v1835
      %v1843 = vpack.c.bf16 %v1838, %v1837
      %v1844 = vpack.c.bf16 %v1840, %v1839
      %v1847 = vunpack.c.l.b16 %v1785
      %v1848 = vunpack.c.h.b16 %v1785
      %v1849 = vunpack.c.l.b16 %v1786
      %v1850 = vunpack.c.h.b16 %v1786
      %v1851 = vpack.c.b16 %v1847, %v1847
      %v1852 = vpack.c.b16 %v1848, %v1848
      %v1853 = vpack.c.b16 %v1849, %v1849
      %v1854 = vpack.c.b16 %v1850, %v1850
      %v1856 = vpack.i.b16 %v1851, %v1851
      %v1858 = vperm.slane %v1856, 0
      %v1860 = vpack.i.b16 %v1852, %v1852
      %v1862 = vperm.slane %v1860, 0
      %v1864 = vpack.i.b16 %v1853, %v1853
      %v1866 = vperm.slane %v1864, 0
      %v1868 = vpack.i.b16 %v1854, %v1854
      %v1870 = vperm.slane %v1868, 0
      %v1871 = vunpack.c.l.bf16 %v1841
      %v1872 = vunpack.c.h.bf16 %v1841
      %v1873 = vunpack.c.l.bf16 %v1842
      %v1874 = vunpack.c.h.bf16 %v1842
      %v1875 = vunpack.c.l.bf16 %v1843
      %v1876 = vunpack.c.h.bf16 %v1843
      %v1877 = vunpack.c.l.bf16 %v1844
      %v1878 = vunpack.c.h.bf16 %v1844
      %v1879 = vunpack.c.l.bf16 %v1858
      %v1880 = vunpack.c.l.bf16 %v1862
      %v1881 = vunpack.c.l.bf16 %v1866
      %v1882 = vunpack.c.l.bf16 %v1870
      %v1883 = vadd.f32 %v1871, %v1879
      %v1884 = vadd.f32 %v1872, %v1880
      %v1885 = vadd.f32 %v1873, %v1881
      %v1886 = vadd.f32 %v1874, %v1882
      %v1887 = vadd.f32 %v1875, %v1879
      %v1888 = vadd.f32 %v1876, %v1880
      %v1889 = vadd.f32 %v1877, %v1881
      %v1890 = vadd.f32 %v1878, %v1882
      %v1891 = vpack.c.bf16 %v1884, %v1883
      %v1892 = vpack.c.bf16 %v1886, %v1885
      %v1893 = vpack.c.bf16 %v1888, %v1887
      %v1894 = vpack.c.bf16 %v1890, %v1889
      %v1895 = vunpack.c.l.bf16 %v1891
      %v1896 = vunpack.c.h.bf16 %v1891
      %v1897 = vunpack.c.l.bf16 %v1892
      %v1898 = vunpack.c.h.bf16 %v1892
      %v1899 = vunpack.c.l.bf16 %v1893
      %v1900 = vunpack.c.h.bf16 %v1893
      %v1901 = vunpack.c.l.bf16 %v1894
      %v1902 = vunpack.c.h.bf16 %v1894
      %v1903 = vmax.f32 %v1895, 0.0
      %v1904 = vmax.f32 %v1896, 0.0
      %v1905 = vmax.f32 %v1897, 0.0
      %v1906 = vmax.f32 %v1898, 0.0
      %v1907 = vmax.f32 %v1899, 0.0
      %v1908 = vmax.f32 %v1900, 0.0
      %v1909 = vmax.f32 %v1901, 0.0
      %v1910 = vmax.f32 %v1902, 0.0
      %v1911 = vpack.c.bf16 %v1907, %v1903
      %v1912 = vpack.c.bf16 %v1908, %v1904
      %v1913 = vpack.c.bf16 %v1909, %v1905
      %v1914 = vpack.c.bf16 %v1910, %v1906
      %v1915 = vld [vmem:[#allocation15] sm:$0xff]
      %v1916 = vld [vmem:[#allocation15 + $0x8] sm:$0xff]
      %v1917 = vld [vmem:[#allocation15 + $0x10] sm:$0xff]
      %v1918 = vld [vmem:[#allocation15 + $0x18] sm:$0xff]
      %v1919 = vld [vmem:[#allocation15 + $0x20] sm:$0xff]
      %v1920 = vld [vmem:[#allocation15 + $0x28] sm:$0xff]
      %v1921 = vld [vmem:[#allocation15 + $0x30] sm:$0xff]
      %v1922 = vld [vmem:[#allocation15 + $0x38] sm:$0xff]
      %v1923 = vld [vmem:[#allocation15 + $0x40] sm:$0xff]
      %v1924 = vld [vmem:[#allocation15 + $0x48] sm:$0xff]
      %v1925 = vld [vmem:[#allocation15 + $0x50] sm:$0xff]
      %v1926 = vld [vmem:[#allocation15 + $0x58] sm:$0xff]
      %v1927 = vld [vmem:[#allocation15 + $0x60] sm:$0xff]
      %v1928 = vld [vmem:[#allocation15 + $0x68] sm:$0xff]
      %v1929 = vld [vmem:[#allocation15 + $0x70] sm:$0xff]
      %v1930 = vld [vmem:[#allocation15 + $0x78] sm:$0xff]
      %v1931 = vld [vmem:[#allocation15 + $0x80] sm:$0xff]
      %v1932 = vld [vmem:[#allocation15 + $0x88] sm:$0xff]
      %v1933 = vld [vmem:[#allocation15 + $0x90] sm:$0xff]
      %v1934 = vld [vmem:[#allocation15 + $0x98] sm:$0xff]
      %v1935 = vld [vmem:[#allocation15 + $0xa0] sm:$0xff]
      %v1936 = vld [vmem:[#allocation15 + $0xa8] sm:$0xff]
      %v1937 = vld [vmem:[#allocation15 + $0xb0] sm:$0xff]
      %v1938 = vld [vmem:[#allocation15 + $0xb8] sm:$0xff]
      %v1939 = vld [vmem:[#allocation15 + $0xc0] sm:$0xff]
      %v1940 = vld [vmem:[#allocation15 + $0xc8] sm:$0xff]
      %v1941 = vld [vmem:[#allocation15 + $0xd0] sm:$0xff]
      %v1942 = vld [vmem:[#allocation15 + $0xd8] sm:$0xff]
      %v1943 = vld [vmem:[#allocation15 + $0xe0] sm:$0xff]
      %v1944 = vld [vmem:[#allocation15 + $0xe8] sm:$0xff]
      %v1945 = vld [vmem:[#allocation15 + $0xf0] sm:$0xff]
      %v1946 = vld [vmem:[#allocation15 + $0xf8] sm:$0xff]
      %v1947 = vld [vmem:[#allocation15 + $0x100] sm:$0xff]
      %v1948 = vld [vmem:[#allocation15 + $0x108] sm:$0xff]
      %v1949 = vld [vmem:[#allocation15 + $0x110] sm:$0xff]
      %v1950 = vld [vmem:[#allocation15 + $0x118] sm:$0xff]
      %v1951 = vld [vmem:[#allocation15 + $0x120] sm:$0xff]
      %v1952 = vld [vmem:[#allocation15 + $0x128] sm:$0xff]
      %v1953 = vld [vmem:[#allocation15 + $0x130] sm:$0xff]
      %v1954 = vld [vmem:[#allocation15 + $0x138] sm:$0xff]
      %v1955 = vld [vmem:[#allocation15 + $0x140] sm:$0xff]
      %v1956 = vld [vmem:[#allocation15 + $0x148] sm:$0xff]
      %v1957 = vld [vmem:[#allocation15 + $0x150] sm:$0xff]
      %v1958 = vld [vmem:[#allocation15 + $0x158] sm:$0xff]
      %v1959 = vld [vmem:[#allocation15 + $0x160] sm:$0xff]
      %v1960 = vld [vmem:[#allocation15 + $0x168] sm:$0xff]
      %v1961 = vld [vmem:[#allocation15 + $0x170] sm:$0xff]
      %v1962 = vld [vmem:[#allocation15 + $0x178] sm:$0xff]
      %v1963 = vld [vmem:[#allocation15 + $0x180] sm:$0xff]
      %v1964 = vld [vmem:[#allocation15 + $0x188] sm:$0xff]
      %v1965 = vld [vmem:[#allocation15 + $0x190] sm:$0xff]
      %v1966 = vld [vmem:[#allocation15 + $0x198] sm:$0xff]
      %v1967 = vld [vmem:[#allocation15 + $0x1a0] sm:$0xff]
      %v1968 = vld [vmem:[#allocation15 + $0x1a8] sm:$0xff]
      %v1969 = vld [vmem:[#allocation15 + $0x1b0] sm:$0xff]
      %v1970 = vld [vmem:[#allocation15 + $0x1b8] sm:$0xff]
      %v1971 = vld [vmem:[#allocation15 + $0x1c0] sm:$0xff]
      %v1972 = vld [vmem:[#allocation15 + $0x1c8] sm:$0xff]
      %v1973 = vld [vmem:[#allocation15 + $0x1d0] sm:$0xff]
      %v1974 = vld [vmem:[#allocation15 + $0x1d8] sm:$0xff]
      %v1975 = vld [vmem:[#allocation15 + $0x1e0] sm:$0xff]
      %v1976 = vld [vmem:[#allocation15 + $0x1e8] sm:$0xff]
      %v1977 = vld [vmem:[#allocation15 + $0x1f0] sm:$0xff]
      %v1978 = vld [vmem:[#allocation15 + $0x1f8] sm:$0xff]
      %v2043 = vunpack.c.l.b16 %v1915
      %v2044 = vunpack.c.h.b16 %v1915
      %v2045 = vunpack.c.l.b16 %v1916
      %v2046 = vunpack.c.h.b16 %v1916
      %v2047 = vunpack.c.l.b16 %v1917
      %v2048 = vunpack.c.h.b16 %v1917
      %v2049 = vunpack.c.l.b16 %v1918
      %v2050 = vunpack.c.h.b16 %v1918
      %v2051 = vunpack.c.l.b16 %v1919
      %v2052 = vunpack.c.h.b16 %v1919
      %v2053 = vunpack.c.l.b16 %v1920
      %v2054 = vunpack.c.h.b16 %v1920
      %v2055 = vunpack.c.l.b16 %v1921
      %v2056 = vunpack.c.h.b16 %v1921
      %v2057 = vunpack.c.l.b16 %v1922
      %v2058 = vunpack.c.h.b16 %v1922
      %v2059 = vunpack.c.l.b16 %v1923
      %v2060 = vunpack.c.h.b16 %v1923
      %v2061 = vunpack.c.l.b16 %v1924
      %v2062 = vunpack.c.h.b16 %v1924
      %v2063 = vunpack.c.l.b16 %v1925
      %v2064 = vunpack.c.h.b16 %v1925
      %v2065 = vunpack.c.l.b16 %v1926
      %v2066 = vunpack.c.h.b16 %v1926
      %v2067 = vunpack.c.l.b16 %v1927
      %v2068 = vunpack.c.h.b16 %v1927
      %v2069 = vunpack.c.l.b16 %v1928
      %v2070 = vunpack.c.h.b16 %v1928
      %v2071 = vunpack.c.l.b16 %v1929
      %v2072 = vunpack.c.h.b16 %v1929
      %v2073 = vunpack.c.l.b16 %v1930
      %v2074 = vunpack.c.h.b16 %v1930
      %v2075 = vunpack.c.l.b16 %v1931
      %v2076 = vunpack.c.h.b16 %v1931
      %v2077 = vunpack.c.l.b16 %v1932
      %v2078 = vunpack.c.h.b16 %v1932
      %v2079 = vunpack.c.l.b16 %v1933
      %v2080 = vunpack.c.h.b16 %v1933
      %v2081 = vunpack.c.l.b16 %v1934
      %v2082 = vunpack.c.h.b16 %v1934
      %v2083 = vunpack.c.l.b16 %v1935
      %v2084 = vunpack.c.h.b16 %v1935
      %v2085 = vunpack.c.l.b16 %v1936
      %v2086 = vunpack.c.h.b16 %v1936
      %v2087 = vunpack.c.l.b16 %v1937
      %v2088 = vunpack.c.h.b16 %v1937
      %v2089 = vunpack.c.l.b16 %v1938
      %v2090 = vunpack.c.h.b16 %v1938
      %v2091 = vunpack.c.l.b16 %v1939
      %v2092 = vunpack.c.h.b16 %v1939
      %v2093 = vunpack.c.l.b16 %v1940
      %v2094 = vunpack.c.h.b16 %v1940
      %v2095 = vunpack.c.l.b16 %v1941
      %v2096 = vunpack.c.h.b16 %v1941
      %v2097 = vunpack.c.l.b16 %v1942
      %v2098 = vunpack.c.h.b16 %v1942
      %v2099 = vunpack.c.l.b16 %v1943
      %v2100 = vunpack.c.h.b16 %v1943
      %v2101 = vunpack.c.l.b16 %v1944
      %v2102 = vunpack.c.h.b16 %v1944
      %v2103 = vunpack.c.l.b16 %v1945
      %v2104 = vunpack.c.h.b16 %v1945
      %v2105 = vunpack.c.l.b16 %v1946
      %v2106 = vunpack.c.h.b16 %v1946
      %v2107 = vunpack.c.l.b16 %v1947
      %v2108 = vunpack.c.h.b16 %v1947
      %v2109 = vunpack.c.l.b16 %v1948
      %v2110 = vunpack.c.h.b16 %v1948
      %v2111 = vunpack.c.l.b16 %v1949
      %v2112 = vunpack.c.h.b16 %v1949
      %v2113 = vunpack.c.l.b16 %v1950
      %v2114 = vunpack.c.h.b16 %v1950
      %v2115 = vunpack.c.l.b16 %v1951
      %v2116 = vunpack.c.h.b16 %v1951
      %v2117 = vunpack.c.l.b16 %v1952
      %v2118 = vunpack.c.h.b16 %v1952
      %v2119 = vunpack.c.l.b16 %v1953
      %v2120 = vunpack.c.h.b16 %v1953
      %v2121 = vunpack.c.l.b16 %v1954
      %v2122 = vunpack.c.h.b16 %v1954
      %v2123 = vunpack.c.l.b16 %v1955
      %v2124 = vunpack.c.h.b16 %v1955
      %v2125 = vunpack.c.l.b16 %v1956
      %v2126 = vunpack.c.h.b16 %v1956
      %v2127 = vunpack.c.l.b16 %v1957
      %v2128 = vunpack.c.h.b16 %v1957
      %v2129 = vunpack.c.l.b16 %v1958
      %v2130 = vunpack.c.h.b16 %v1958
      %v2131 = vunpack.c.l.b16 %v1959
      %v2132 = vunpack.c.h.b16 %v1959
      %v2133 = vunpack.c.l.b16 %v1960
      %v2134 = vunpack.c.h.b16 %v1960
      %v2135 = vunpack.c.l.b16 %v1961
      %v2136 = vunpack.c.h.b16 %v1961
      %v2137 = vunpack.c.l.b16 %v1962
      %v2138 = vunpack.c.h.b16 %v1962
      %v2139 = vunpack.c.l.b16 %v1963
      %v2140 = vunpack.c.h.b16 %v1963
      %v2141 = vunpack.c.l.b16 %v1964
      %v2142 = vunpack.c.h.b16 %v1964
      %v2143 = vunpack.c.l.b16 %v1965
      %v2144 = vunpack.c.h.b16 %v1965
      %v2145 = vunpack.c.l.b16 %v1966
      %v2146 = vunpack.c.h.b16 %v1966
      %v2147 = vunpack.c.l.b16 %v1967
      %v2148 = vunpack.c.h.b16 %v1967
      %v2149 = vunpack.c.l.b16 %v1968
      %v2150 = vunpack.c.h.b16 %v1968
      %v2151 = vunpack.c.l.b16 %v1969
      %v2152 = vunpack.c.h.b16 %v1969
      %v2153 = vunpack.c.l.b16 %v1970
      %v2154 = vunpack.c.h.b16 %v1970
      %v2155 = vunpack.c.l.b16 %v1971
      %v2156 = vunpack.c.h.b16 %v1971
      %v2157 = vunpack.c.l.b16 %v1972
      %v2158 = vunpack.c.h.b16 %v1972
      %v2159 = vunpack.c.l.b16 %v1973
      %v2160 = vunpack.c.h.b16 %v1973
      %v2161 = vunpack.c.l.b16 %v1974
      %v2162 = vunpack.c.h.b16 %v1974
      %v2163 = vunpack.c.l.b16 %v1975
      %v2164 = vunpack.c.h.b16 %v1975
      %v2165 = vunpack.c.l.b16 %v1976
      %v2166 = vunpack.c.h.b16 %v1976
      %v2167 = vunpack.c.l.b16 %v1977
      %v2168 = vunpack.c.h.b16 %v1977
      %v2169 = vunpack.c.l.b16 %v1978
      %v2170 = vunpack.c.h.b16 %v1978
      %v2171 = vpack.c.b16 %v2045, %v2043
      %v2172 = vpack.c.b16 %v2046, %v2044
      %v2173 = vpack.c.b16 %v2049, %v2047
      %v2174 = vpack.c.b16 %v2050, %v2048
      %v2175 = vpack.c.b16 %v2053, %v2051
      %v2176 = vpack.c.b16 %v2054, %v2052
      %v2177 = vpack.c.b16 %v2057, %v2055
      %v2178 = vpack.c.b16 %v2058, %v2056
      %v2179 = vpack.c.b16 %v2061, %v2059
      %v2180 = vpack.c.b16 %v2062, %v2060
      %v2181 = vpack.c.b16 %v2065, %v2063
      %v2182 = vpack.c.b16 %v2066, %v2064
      %v2183 = vpack.c.b16 %v2069, %v2067
      %v2184 = vpack.c.b16 %v2070, %v2068
      %v2185 = vpack.c.b16 %v2073, %v2071
      %v2186 = vpack.c.b16 %v2074, %v2072
      %v2187 = vpack.c.b16 %v2077, %v2075
      %v2188 = vpack.c.b16 %v2078, %v2076
      %v2189 = vpack.c.b16 %v2081, %v2079
      %v2190 = vpack.c.b16 %v2082, %v2080
      %v2191 = vpack.c.b16 %v2085, %v2083
      %v2192 = vpack.c.b16 %v2086, %v2084
      %v2193 = vpack.c.b16 %v2089, %v2087
      %v2194 = vpack.c.b16 %v2090, %v2088
      %v2195 = vpack.c.b16 %v2093, %v2091
      %v2196 = vpack.c.b16 %v2094, %v2092
      %v2197 = vpack.c.b16 %v2097, %v2095
      %v2198 = vpack.c.b16 %v2098, %v2096
      %v2199 = vpack.c.b16 %v2101, %v2099
      %v2200 = vpack.c.b16 %v2102, %v2100
      %v2201 = vpack.c.b16 %v2105, %v2103
      %v2202 = vpack.c.b16 %v2106, %v2104
      %v2203 = vpack.c.b16 %v2109, %v2107
      %v2204 = vpack.c.b16 %v2110, %v2108
      %v2205 = vpack.c.b16 %v2113, %v2111
      %v2206 = vpack.c.b16 %v2114, %v2112
      %v2207 = vpack.c.b16 %v2117, %v2115
      %v2208 = vpack.c.b16 %v2118, %v2116
      %v2209 = vpack.c.b16 %v2121, %v2119
      %v2210 = vpack.c.b16 %v2122, %v2120
      %v2211 = vpack.c.b16 %v2125, %v2123
      %v2212 = vpack.c.b16 %v2126, %v2124
      %v2213 = vpack.c.b16 %v2129, %v2127
      %v2214 = vpack.c.b16 %v2130, %v2128
      %v2215 = vpack.c.b16 %v2133, %v2131
      %v2216 = vpack.c.b16 %v2134, %v2132
      %v2217 = vpack.c.b16 %v2137, %v2135
      %v2218 = vpack.c.b16 %v2138, %v2136
      %v2219 = vpack.c.b16 %v2141, %v2139
      %v2220 = vpack.c.b16 %v2142, %v2140
      %v2221 = vpack.c.b16 %v2145, %v2143
      %v2222 = vpack.c.b16 %v2146, %v2144
      %v2223 = vpack.c.b16 %v2149, %v2147
      %v2224 = vpack.c.b16 %v2150, %v2148
      %v2225 = vpack.c.b16 %v2153, %v2151
      %v2226 = vpack.c.b16 %v2154, %v2152
      %v2227 = vpack.c.b16 %v2157, %v2155
      %v2228 = vpack.c.b16 %v2158, %v2156
      %v2229 = vpack.c.b16 %v2161, %v2159
      %v2230 = vpack.c.b16 %v2162, %v2160
      %v2231 = vpack.c.b16 %v2165, %v2163
      %v2232 = vpack.c.b16 %v2166, %v2164
      %v2233 = vpack.c.b16 %v2169, %v2167
      %v2234 = vpack.c.b16 %v2170, %v2168
      %2299 = vmatpush.bf16.msra.mxu0 %v2185
      %2300 = vmatpush.bf16.msra.mxu0 %v2183
      %2301 = vmatpush.bf16.msra.mxu0 %v2181
      %2302 = vmatpush.bf16.msra.mxu0 %v2179
      %2303 = vmatpush.bf16.msra.mxu0 %v2177
      %2304 = vmatpush.bf16.msra.mxu0 %v2175
      %2305 = vmatpush.bf16.msra.mxu0 %v2173
      %2306 = vmatpush.bf16.msra.mxu0 %v2171
      %2307 = vmatmul.bf16.gmra.mxu0 %v1911
      %v2308 = vpop.f32.mrf.mxu0
      %v2309 = vadd.f32 0.0, %v2308
      %v2310 = vpop.f32.mrf.mxu0
      %v2311 = vadd.f32 0.0, %v2310
      %2312 = vdwg.mxu0
      %2313 = vmatpush.bf16.msra.mxu0 %v2201
      %2314 = vmatpush.bf16.msra.mxu0 %v2199
      %2315 = vmatpush.bf16.msra.mxu0 %v2197
      %2316 = vmatpush.bf16.msra.mxu0 %v2195
      %2317 = vmatpush.bf16.msra.mxu0 %v2193
      %2318 = vmatpush.bf16.msra.mxu0 %v2191
      %2319 = vmatpush.bf16.msra.mxu0 %v2189
      %2320 = vmatpush.bf16.msra.mxu0 %v2187
      %2321 = vmatmul.bf16.gmra.mxu0 %v1912
      %v2322 = vpop.f32.mrf.mxu0
      %v2323 = vadd.f32 %v2309, %v2322
      %v2324 = vpop.f32.mrf.mxu0
      %v2325 = vadd.f32 %v2311, %v2324
      %2326 = vdwg.mxu0
      %2327 = vmatpush.bf16.msra.mxu0 %v2217
      %2328 = vmatpush.bf16.msra.mxu0 %v2215
      %2329 = vmatpush.bf16.msra.mxu0 %v2213
      %2330 = vmatpush.bf16.msra.mxu0 %v2211
      %2331 = vmatpush.bf16.msra.mxu0 %v2209
      %2332 = vmatpush.bf16.msra.mxu0 %v2207
      %2333 = vmatpush.bf16.msra.mxu0 %v2205
      %2334 = vmatpush.bf16.msra.mxu0 %v2203
      %2335 = vmatmul.bf16.gmra.mxu0 %v1913
      %v2336 = vpop.f32.mrf.mxu0
      %v2337 = vadd.f32 %v2323, %v2336
      %v2338 = vpop.f32.mrf.mxu0
      %v2339 = vadd.f32 %v2325, %v2338
      %2340 = vdwg.mxu0
      %2341 = vmatpush.bf16.msra.mxu0 %v2233
      %2342 = vmatpush.bf16.msra.mxu0 %v2231
      %2343 = vmatpush.bf16.msra.mxu0 %v2229
      %2344 = vmatpush.bf16.msra.mxu0 %v2227
      %2345 = vmatpush.bf16.msra.mxu0 %v2225
      %2346 = vmatpush.bf16.msra.mxu0 %v2223
      %2347 = vmatpush.bf16.msra.mxu0 %v2221
      %2348 = vmatpush.bf16.msra.mxu0 %v2219
      %2349 = vmatmul.bf16.gmra.mxu0 %v1914
      %v2350 = vpop.f32.mrf.mxu0
      %v2351 = vadd.f32 %v2337, %v2350
      %v2352 = vpop.f32.mrf.mxu0
      %v2353 = vadd.f32 %v2339, %v2352
      %2354 = vdwg.mxu0
      %2355 = vmatpush.bf16.msra.mxu0 %v2186
      %2356 = vmatpush.bf16.msra.mxu0 %v2184
      %2357 = vmatpush.bf16.msra.mxu0 %v2182
      %2358 = vmatpush.bf16.msra.mxu0 %v2180
      %2359 = vmatpush.bf16.msra.mxu0 %v2178
      %2360 = vmatpush.bf16.msra.mxu0 %v2176
      %2361 = vmatpush.bf16.msra.mxu0 %v2174
      %2362 = vmatpush.bf16.msra.mxu0 %v2172
      %2363 = vmatmul.bf16.gmra.mxu0 %v1911
      %v2364 = vpop.f32.mrf.mxu0
      %v2365 = vadd.f32 0.0, %v2364
      %v2366 = vpop.f32.mrf.mxu0
      %v2367 = vadd.f32 0.0, %v2366
      %2368 = vdwg.mxu0
      %2369 = vmatpush.bf16.msra.mxu0 %v2202
      %2370 = vmatpush.bf16.msra.mxu0 %v2200
      %2371 = vmatpush.bf16.msra.mxu0 %v2198
      %2372 = vmatpush.bf16.msra.mxu0 %v2196
      %2373 = vmatpush.bf16.msra.mxu0 %v2194
      %2374 = vmatpush.bf16.msra.mxu0 %v2192
      %2375 = vmatpush.bf16.msra.mxu0 %v2190
      %2376 = vmatpush.bf16.msra.mxu0 %v2188
      %2377 = vmatmul.bf16.gmra.mxu0 %v1912
      %v2378 = vpop.f32.mrf.mxu0
      %v2379 = vadd.f32 %v2365, %v2378
      %v2380 = vpop.f32.mrf.mxu0
      %v2381 = vadd.f32 %v2367, %v2380
      %2382 = vdwg.mxu0
      %2383 = vmatpush.bf16.msra.mxu0 %v2218
      %2384 = vmatpush.bf16.msra.mxu0 %v2216
      %2385 = vmatpush.bf16.msra.mxu0 %v2214
      %2386 = vmatpush.bf16.msra.mxu0 %v2212
      %2387 = vmatpush.bf16.msra.mxu0 %v2210
      %2388 = vmatpush.bf16.msra.mxu0 %v2208
      %2389 = vmatpush.bf16.msra.mxu0 %v2206
      %2390 = vmatpush.bf16.msra.mxu0 %v2204
      %2391 = vmatmul.bf16.gmra.mxu0 %v1913
      %v2392 = vpop.f32.mrf.mxu0
      %v2393 = vadd.f32 %v2379, %v2392
      %v2394 = vpop.f32.mrf.mxu0
      %v2395 = vadd.f32 %v2381, %v2394
      %2396 = vdwg.mxu0
      %2397 = vmatpush.bf16.msra.mxu0 %v2234
      %2398 = vmatpush.bf16.msra.mxu0 %v2232
      %2399 = vmatpush.bf16.msra.mxu0 %v2230
      %2400 = vmatpush.bf16.msra.mxu0 %v2228
      %2401 = vmatpush.bf16.msra.mxu0 %v2226
      %2402 = vmatpush.bf16.msra.mxu0 %v2224
      %2403 = vmatpush.bf16.msra.mxu0 %v2222
      %2404 = vmatpush.bf16.msra.mxu0 %v2220
      %2405 = vmatmul.bf16.gmra.mxu0 %v1914
      %v2406 = vpop.f32.mrf.mxu0
      %v2407 = vadd.f32 %v2393, %v2406
      %v2408 = vpop.f32.mrf.mxu0
      %v2409 = vadd.f32 %v2395, %v2408
      %2410 = vdwg.mxu0
      %v2411 = vld [vmem:[#allocation6] sm:$0x3]
      %v2412 = vadd.f32 %v2351, %v2353
      %v2413 = vrot.slane %v2412, 4
      %v2414 = vadd.f32 %v2412, %v2413
      %v2415 = vrot.slane %v2414, 2
      %v2416 = vadd.f32 %v2414, %v2415
      %v2417 = vrot.slane %v2416, 1
      %v2418 = vadd.f32 %v2416, %v2417
      %v2419 = vadd.f32 %v2407, %v2409
      %v2420 = vrot.slane %v2419, 4
      %v2421 = vadd.f32 %v2419, %v2420
      %v2422 = vrot.slane %v2421, 2
      %v2423 = vadd.f32 %v2421, %v2422
      %v2424 = vrot.slane %v2423, 1
      %v2425 = vadd.f32 %v2423, %v2424
      %v2428 = vrot.slane %v2425, 7
      %v2429 = vsel %vm1665, %v2418, %v2428
      %v2431 = vadd.f32 %v2411, %v2429
      %2432 = vst.msk [vmem:[#allocation6] sm:$0x3] %vm1788, %v2431
      %v2433 = vld [vmem:[#allocation7] sm:$0x3]
      %v2434 = vmul.f32 %v2351, %v2351
      %v2435 = vmul.f32 %v2407, %v2407
      %v2436 = vmul.f32 %v2353, %v2353
      %v2437 = vmul.f32 %v2409, %v2409
      %v2438 = vadd.f32 %v2434, %v2436
      %v2439 = vrot.slane %v2438, 4
      %v2440 = vadd.f32 %v2438, %v2439
      %v2441 = vrot.slane %v2440, 2
      %v2442 = vadd.f32 %v2440, %v2441
      %v2443 = vrot.slane %v2442, 1
      %v2444 = vadd.f32 %v2442, %v2443
      %v2445 = vadd.f32 %v2435, %v2437
      %v2446 = vrot.slane %v2445, 4
      %v2447 = vadd.f32 %v2445, %v2446
      %v2448 = vrot.slane %v2447, 2
      %v2449 = vadd.f32 %v2447, %v2448
      %v2450 = vrot.slane %v2449, 1
      %v2451 = vadd.f32 %v2449, %v2450
      %v2454 = vrot.slane %v2451, 7
      %v2455 = vsel %vm1665, %v2444, %v2454
      %v2457 = vadd.f32 %v2433, %v2455
      %2458 = vst.msk [vmem:[#allocation7] sm:$0x3] %vm1788, %v2457
      %v2459 = vpack.c.bf16 %v2407, %v2351
      %v2460 = vpack.c.bf16 %v2409, %v2353
      %2461 = vst [vmem:[#allocation3] sm:$0xff] %v2459
      %2462 = vst [vmem:[#allocation3 + $0x8] sm:$0xff] %v2460
      %v2463 = vld [vmem:[#allocation6] sm:$0x3]
      %v2464 = vld [vmem:[#allocation7] sm:$0x3]
      %v2465 = vld [vmem:[%s5] sm:$0x3]
      %v2466 = vld [vmem:[#allocation17] sm:$0x3]
      %v2467 = vmul.f32 %v2463, 0.0625
      %v2468 = vmul.f32 %v2464, 0.0625
      %v2469 = vmul.f32 %v2467, %v2467
      %v2470 = vsub.f32 %v2468, %v2469
      %v2471 = vmax.f32 %v2470, 0.0
      %v2472 = vadd.f32 %v2471, 1e-05
      %v2473 = vrsqrt.pop %v2472
      %v2474 = vmul.f32 %v2473, %v2472
      %v2475 = vmul.f32 %v2474, %v2473
      %v2476 = vmul.f32 0.5, %v2475
      %v2477 = vsub.f32 1.5, %v2476
      %v2478 = vmul.f32 %v2473, %v2477
      %vm2479 = vweird.f32 %v2472
      %vm2480 = vweird.f32 %v2473
      %vm2481 = vmor %vm2479, %vm2480
      %v2482 = vsel %vm2481, %v2473, %v2478
      %v2483 = vmul.f32 %v2465, %v2482
      %v2484 = vmul.f32 %v2467, %v2483
      %v2485 = vsub.f32 %v2466, %v2484
      %v2487 = vperm.slane %v2483, 0
      %v2488 = vperm.slane %v2483, 1
      %v2491 = vpack.c.bf16 %v2488, %v2487
      %v2493 = vperm.slane %v2485, 0
      %v2494 = vperm.slane %v2485, 1
      %v2497 = vpack.c.bf16 %v2494, %v2493
      %v2498 = vld [vmem:[%s7] sm:$0x3]
      %v2499 = vunpack.c.l.bf16 %v2498
      %v2500 = vld [vmem:[#allocation3] sm:$0xff]
      %v2501 = vld [vmem:[#allocation3 + $0x8] sm:$0xff]
      %v2503 = vunpack.c.l.b16 %v2491
      %v2504 = vunpack.c.h.b16 %v2491
      %v2505 = vpack.c.b16 %v2503, %v2503
      %v2506 = vpack.c.b16 %v2504, %v2504
      %v2508 = vpack.i.b16 %v2505, %v2505
      %v2510 = vperm.slane %v2508, 0
      %v2512 = vpack.i.b16 %v2506, %v2506
      %v2514 = vperm.slane %v2512, 0
      %v2515 = vunpack.c.l.bf16 %v2500
      %v2516 = vunpack.c.h.bf16 %v2500
      %v2517 = vunpack.c.l.bf16 %v2501
      %v2518 = vunpack.c.h.bf16 %v2501
      %v2519 = vunpack.c.l.bf16 %v2510
      %v2520 = vunpack.c.l.bf16 %v2514
      %v2521 = vmul.f32 %v2515, %v2519
      %v2522 = vmul.f32 %v2516, %v2520
      %v2523 = vmul.f32 %v2517, %v2519
      %v2524 = vmul.f32 %v2518, %v2520
      %v2525 = vpack.c.bf16 %v2522, %v2521
      %v2526 = vpack.c.bf16 %v2524, %v2523
      %v2528 = vunpack.c.l.b16 %v2497
      %v2529 = vunpack.c.h.b16 %v2497
      %v2530 = vpack.c.b16 %v2528, %v2528
      %v2531 = vpack.c.b16 %v2529, %v2529
      %v2533 = vpack.i.b16 %v2530, %v2530
      %v2535 = vperm.slane %v2533, 0
      %v2537 = vpack.i.b16 %v2531, %v2531
      %v2539 = vperm.slane %v2537, 0
      %v2540 = vunpack.c.l.bf16 %v2525
      %v2541 = vunpack.c.h.bf16 %v2525
      %v2542 = vunpack.c.l.bf16 %v2526
      %v2543 = vunpack.c.h.bf16 %v2526
      %v2544 = vunpack.c.l.bf16 %v2535
      %v2545 = vunpack.c.l.bf16 %v2539
      %v2546 = vadd.f32 %v2540, %v2544
      %v2547 = vadd.f32 %v2541, %v2545
      %v2548 = vadd.f32 %v2542, %v2544
      %v2549 = vadd.f32 %v2543, %v2545
      %v2550 = vpack.c.bf16 %v2547, %v2546
      %v2551 = vpack.c.bf16 %v2549, %v2548
      %v2552 = vunpack.c.l.bf16 %v2550
      %v2553 = vunpack.c.h.bf16 %v2550
      %v2554 = vunpack.c.l.bf16 %v2551
      %v2555 = vunpack.c.h.bf16 %v2551
      %v2556 = vmax.f32 %v2552, 0.0
      %v2557 = vmax.f32 %v2553, 0.0
      %v2558 = vmax.f32 %v2554, 0.0
      %v2559 = vmax.f32 %v2555, 0.0
      %v2560 = vpack.c.bf16 %v2557, %v2556
      %v2561 = vpack.c.bf16 %v2559, %v2558
      %v2562 = vunpack.c.l.bf16 %v2560
      %v2563 = vunpack.c.h.bf16 %v2560
      %v2564 = vunpack.c.l.bf16 %v2561
      %v2565 = vunpack.c.h.bf16 %v2561
      %v2567 = vperm.slane %v2499, 0
      %v2568 = vperm.slane %v2499, 2
      %v2571 = vperm.slane %v2567, 0
      %v2572 = vperm.slane %v2568, 0
      %v2573 = vmul.f32 %v2562, %v2571
      %v2574 = vmul.f32 %v2563, %v2572
      %v2575 = vmul.f32 %v2564, %v2571
      %v2576 = vmul.f32 %v2565, %v2572
      %v2577 = vadd.f32 %v2573, %v2574
      %2578 = vadd.xlane.f32.xlu0 %v2577
      %v2579 = vpop.xlane.xlu0 %2578
      %v2580 = vadd.f32 %v2575, %v2576
      %2581 = vadd.xlane.f32.xlu0 %v2580
      %v2582 = vpop.xlane.xlu0 %2581
      %vm2583 = vcmask 7168
      %2584 = vst.msk [vmem:[%s10] sm:$0xff] %vm2583, %v2579
      %2585 = vst.msk [vmem:[%s10 + $0x8] sm:$0xff] %vm2583, %v2582
      %v2586 = vld [vmem:[%s10] sm:$0xff]
      %v2587 = vld [vmem:[%s10 + $0x8] sm:$0xff]
      %v2588 = vadd.f32 %v2586, 0.0
      %v2589 = vadd.f32 %v2587, 0.0
      %v2590 = vsel %vm2583, %v2588, 0.0
      %v2591 = vsel %vm2583, %v2589, 0.0
      %v2592 = vadd.f32 %v2590, %v2591
      %v2593 = vrot.slane %v2592, 4
      %v2594 = vadd.f32 %v2592, %v2593
      %v2595 = vrot.slane %v2594, 2
      %v2596 = vadd.f32 %v2594, %v2595
      %v2597 = vrot.slane %v2596, 1
      %v2598 = vadd.f32 %v2596, %v2597
      %v2599 = vmul.f32 %v2586, %v2586
      %v2600 = vmul.f32 %v2587, %v2587
      %v2601 = vadd.f32 %v2599, 0.0
      %v2602 = vadd.f32 %v2600, 0.0
      %v2603 = vsel %vm2583, %v2601, 0.0
      %v2604 = vsel %vm2583, %v2602, 0.0
      %v2605 = vadd.f32 %v2603, %v2604
      %v2606 = vrot.slane %v2605, 4
      %v2607 = vadd.f32 %v2605, %v2606
      %v2608 = vrot.slane %v2607, 2
      %v2609 = vadd.f32 %v2607, %v2608
      %v2610 = vrot.slane %v2609, 1
      %v2611 = vadd.f32 %v2609, %v2610
      %v2612 = vld [vmem:[#allocation8] sm:$0x1]
      %v2613 = vld [vmem:[#allocation9] sm:$0x1]
      %v2614 = vmul.f32 %v2598, 0.0625
      %v2615 = vmul.f32 %v2611, 0.0625
      %v2616 = vmul.f32 %v2614, %v2614
      %v2617 = vsub.f32 %v2615, %v2616
      %v2618 = vmax.f32 %v2617, 0.0
      %v2619 = vadd.f32 %v2618, 1e-05
      %v2620 = vrsqrt.pop %v2619
      %v2621 = vmul.f32 %v2620, %v2619
      %v2622 = vmul.f32 %v2621, %v2620
      %v2623 = vmul.f32 0.5, %v2622
      %v2624 = vsub.f32 1.5, %v2623
      %v2625 = vmul.f32 %v2620, %v2624
      %vm2626 = vweird.f32 %v2619
      %vm2627 = vweird.f32 %v2620
      %vm2628 = vmor %vm2626, %vm2627
      %v2629 = vsel %vm2628, %v2620, %v2625
      %v2630 = vmul.f32 %v2612, %v2629
      %v2631 = vmul.f32 %v2614, %v2630
      %v2632 = vsub.f32 %v2613, %v2631
      %v2634 = vperm.slane %v2630, 0
      %v2636 = vmul.f32 %v2586, %v2634
      %v2637 = vmul.f32 %v2587, %v2634
      %v2639 = vperm.slane %v2632, 0
      %v2641 = vadd.f32 %v2636, %v2639
      %v2642 = vadd.f32 %v2637, %v2639
      %v2643 = vand.u32 2147483647, %v2641
      %v2644 = vand.u32 2147483647, %v2642
      %v2645 = vsub.f32 0.0, %v2643
      %v2646 = vsub.f32 0.0, %v2644
      %v2647 = vmul.f32 %v2645, 1.442695
      %v2648 = vpow.pop %v2647
      %v2649 = vmul.f32 %v2646, 1.442695
      %v2650 = vpow.pop %v2649
      %v2651 = vadd.f32 %v2648, 1.0
      %v2652 = vadd.f32 %v2650, 1.0
      %v2653 = vrcp.pop %v2651
      %v2654 = vrcp.pop %v2652
      %vm2655 = vcmp.ge.f32.partialorder %v2641, 0.0
      %vm2656 = vcmp.ge.f32.partialorder %v2642, 0.0
      %v2657 = vmul.f32 %v2648, %v2653
      %v2658 = vmul.f32 %v2650, %v2654
      %v2659 = vsel %vm2655, %v2653, %v2657
      %v2660 = vsel %vm2656, %v2654, %v2658
      %2661 = vst.msk [vmem:[%s10] sm:$0xff] %vm2583, %v2659
      %2662 = vst.msk [vmem:[%s10 + $0x8] sm:$0xff] %vm2583, %v2660
    $region69: #{discriminator_forward.1} parent=1 // pred_fallthru
      _
    // Predicated region
    $region70: #{discriminator_forward.1} parent=1 // pred_check
      _
    $region71: #{discriminator_forward.1} parent=1 // pred_check_branch
      %2664 = sbr.rel (0) target = $region73
    $region72: #{discriminator_forward.1} parent=1 // pred_region
      _
    $region73: #{discriminator_forward.1} parent=1 // pred_fallthru
      _
    // Predicated region
    $region74: #{discriminator_forward.1} parent=1 // pred_check
      _
    $region75: #{discriminator_forward.1} parent=1 // pred_check_branch
      %2666 = sbr.rel (0) target = $region77
    $region76: #{discriminator_forward.1} parent=1 // pred_region
      _
    $region77: #{discriminator_forward.1} parent=1 // pred_fallthru
      _
    %2667 = vsyncpa [#allocation11], 1
    %2668 = vsyncpa [#allocation13], 1
    %2669 = vsyncpa [#allocation16], 1

</llo_original>
